<compile_context>
chip_gen: v5e
topology: v5e:2x2
jax: 0.10.0
libtpu: 0.0.40
codegen_flags: <defaults>
</compile_context>

<pallas_src>
import jax
import jax.numpy as jnp
from jax.experimental import pallas as pl
from jax.experimental.pallas import tpu as pltpu


def gdn_kernel(x_ref, w1_ref, b1_ref, t1_ref, w2_ref, b2_ref,
               inter_ref, prob_ref):
    """One batch-tile of the GDN forward.

    x_ref:  (tm, inplanes)                            (bf16 or f32)
    w1_ref: (inplanes, intermediate_dim)              b1_ref/t1_ref: (1, intermediate_dim)
    w2_ref: (intermediate_dim, outplanes_padded)      b2_ref: (1, outplanes_padded)
    inter_ref: (tm, intermediate_dim)  [input dtype]  prob_ref: (tm, outplanes_padded) f32
    """
    # fc1: Linear (MXU, f32 accumulation) + FReLU (relu(x) + per-feature bias)
    h = jnp.dot(x_ref[...], w1_ref[...], preferred_element_type=jnp.float32)
    h = h + b1_ref[...]
    inter_f32 = jnp.maximum(h, 0.0) + t1_ref[...]
    inter = inter_f32.astype(inter_ref.dtype)
    inter_ref[...] = inter

    # fc2: Linear on the (possibly bf16) intermediate, f32 accumulation
    logits = jnp.dot(inter.astype(w2_ref.dtype), w2_ref[...],
                     preferred_element_type=jnp.float32) + b2_ref[...]

    # softmax over dim=1 (features), numerically stable.
    # Padded feature columns carry a -1e30 bias so exp() underflows to exactly 0
    # and does not perturb the normalization of the real columns.
    m = jnp.max(logits, axis=1, keepdims=True)
    e = jnp.exp(logits - m)
    denom = jnp.sum(e, axis=1, keepdims=True)
    prob_ref[...] = (e * pl.reciprocal(denom, approx=True)).astype(prob_ref.dtype)


def _round_up(x, m):
    return (x + m - 1) // m * m


def _choose_tm(n_padded, inplanes, interm, out_pad, x_bytes, w_bytes,
               budget_bytes, min_tile):
    """Largest power-of-two batch tile (<=512) that divides n_padded, fits the
    VMEM budget (conservatively assuming everything is double-buffered), and
    leaves >= 2 grid steps when possible (v7x has 2 TensorCores)."""
    weights = (inplanes * interm + interm * out_pad) * w_bytes \
        + (2 * interm + out_pad) * 4
    tm = min_tile
    for cand in (512, 256, 128, 64, 32, 16, 8):
        if cand < min_tile or n_padded % cand:
            continue
        act = cand * (inplanes * x_bytes + interm * x_bytes + out_pad * 4)
        if 2 * (act + weights) > budget_bytes:
            continue
        tm = cand
        break
    while tm > min_tile and n_padded // tm < 2:
        tm //= 2
    return tm


def gdn_forward(x, w1, b1, t1, w2, b2, *, tm=None,
                vmem_budget_bytes=20 * 1024 * 1024):
    """GDN forward. Weights stored pre-transposed as (in_features, out_features).

    Returns (intermediate [x.dtype], softmax_probs [f32])."""
    N, inplanes = x.shape
    interm = w1.shape[1]
    outplanes = w2.shape[1]

    x_bytes = jnp.dtype(x.dtype).itemsize
    w_bytes = jnp.dtype(w1.dtype).itemsize
    # sublane granularity for the batch tile (8 for f32, 16 for bf16, ...)
    min_tile = 8 * max(1, 4 // x_bytes)

    # --- padding for dense tiles ------------------------------------------
    n_pad = _round_up(N, min_tile)
    out_pad = _round_up(outplanes, 128)          # lane-dense softmax output
    if n_pad != N:
        x = jnp.pad(x, ((0, n_pad - N), (0, 0)))
    if out_pad != outplanes:
        w2 = jnp.pad(w2, ((0, 0), (0, out_pad - outplanes)))
        b2 = jnp.pad(b2, ((0, 0), (0, out_pad - outplanes)),
                     constant_values=-1e30)

    if tm is None:
        tm = _choose_tm(n_pad, inplanes, interm, out_pad, x_bytes, w_bytes,
                        vmem_budget_bytes, min_tile)
    assert n_pad % tm == 0, "padded batch must be divisible by the batch tile"
    grid = (n_pad // tm,)

    out_shape = (
        jax.ShapeDtypeStruct((n_pad, interm), x.dtype),     # intermediate
        jax.ShapeDtypeStruct((n_pad, out_pad), jnp.float32),  # softmax probs
    )

    def _run(single_buffer_weights):
        # Grid-invariant operands: single-buffer them to halve their VMEM
        # footprint (their index_map is constant, double-buffering is wasted).
        wkw = dict(pipeline_mode=pl.Buffered(1)) if single_buffer_weights else {}
        grid_spec = pltpu.PrefetchScalarGridSpec(
            num_scalar_prefetch=0,
            grid=grid,
            in_specs=[
                pl.BlockSpec((tm, inplanes), lambda i: (i, 0)),            # x tile
                pl.BlockSpec((inplanes, interm), lambda i: (0, 0), **wkw),  # W1
                pl.BlockSpec((1, interm), lambda i: (0, 0), **wkw),         # b1
                pl.BlockSpec((1, interm), lambda i: (0, 0), **wkw),         # FReLU bias
                pl.BlockSpec((interm, out_pad), lambda i: (0, 0), **wkw),   # W2
                pl.BlockSpec((1, out_pad), lambda i: (0, 0), **wkw),        # b2
            ],
            out_specs=[
                pl.BlockSpec((tm, interm), lambda i: (i, 0)),       # intermediate
                pl.BlockSpec((tm, out_pad), lambda i: (i, 0)),      # softmax probs
            ],
        )
        return pl.pallas_call(
            gdn_kernel,
            grid_spec=grid_spec,
            out_shape=out_shape,
            compiler_params=pltpu.CompilerParams(
                dimension_semantics=("parallel",),
                vmem_limit_bytes=32 * 1024 * 1024),
        )(x, w1, b1, t1, w2, b2)

    try:
        inter, probs = _run(True)
    except Exception:
        # Fallback for Pallas versions without pipeline_mode / Buffered(1).
        inter, probs = _run(False)

    return inter[:N], probs[:N, :outplanes]


def init_params(key, inplanes, interm, outplanes, *, weight_dtype=jnp.bfloat16):
    """Deterministic init mimicking torch.nn.Linear defaults."""
    k1, k2, k3, k4 = jax.random.split(key, 4)
    bound1 = 1.0 / jnp.sqrt(inplanes)
    bound2 = 1.0 / jnp.sqrt(interm)
    # stored as (in, out) == transpose of torch's (out, in)
    w1 = jax.random.uniform(k1, (inplanes, interm), jnp.float32,
                            -bound1, bound1).astype(weight_dtype)
    b1 = jax.random.uniform(k2, (1, interm), jnp.float32, -bound1, bound1)
    t1 = jnp.zeros((1, interm), jnp.float32)   # FReLU per-feature bias, init 0
    w2 = jax.random.uniform(k3, (interm, outplanes), jnp.float32,
                            -bound2, bound2).astype(weight_dtype)
    b2 = jax.random.uniform(k4, (1, outplanes), jnp.float32, -bound2, bound2)
    return w1, b1, t1, w2, b2


def gdn_reference(x, w1, b1, t1, w2, b2):
    """Pure-JAX reference mirroring the kernel's precision choices."""
    xf = x.astype(jnp.float32)
    inter = jnp.maximum(xf @ w1.astype(jnp.float32) + b1, 0.0) + t1
    inter = inter.astype(x.dtype)                       # kernel stores input dtype
    logits = inter.astype(jnp.float32) @ w2.astype(jnp.float32) + b2
    return inter, jax.nn.softmax(logits, axis=1)


if __name__ == "__main__":
    batch, inplanes, intermediate_dim, outplanes = 32, 32, 256, 16

    key = jax.random.PRNGKey(0)
    kx, kp = jax.random.split(key)
    x = jax.random.normal(kx, (batch, inplanes), jnp.float32).astype(jnp.bfloat16)
    w1, b1, t1, w2, b2 = init_params(kp, inplanes, intermediate_dim, outplanes,
                                     weight_dtype=jnp.bfloat16)

    inter, probs = gdn_forward(x, w1, b1, t1, w2, b2)
    jax.block_until_ready((inter, probs))

    ref_inter, ref_probs = gdn_reference(x, w1, b1, t1, w2, b2)
    assert inter.shape == (batch, intermediate_dim) and inter.dtype == x.dtype
    assert probs.shape == (batch, outplanes) and probs.dtype == jnp.float32
    assert jnp.allclose(inter.astype(jnp.float32), ref_inter.astype(jnp.float32),
                        atol=2e-2, rtol=2e-2)
    assert jnp.allclose(probs, ref_probs, atol=2e-2, rtol=2e-2)
    assert jnp.allclose(jnp.sum(probs, axis=1), 1.0, atol=2e-2)

    print("KERNEL_OK")
</pallas_src>

<mosaic_0001>
module attributes {stable_mosaic.version = 11 : i64} {
  func.func @gdn_kernel(%arg0: i32, %arg1: memref<16x32xbf16, #tpu.memory_space<vmem>>, %arg2: memref<32x256xbf16, #tpu.memory_space<vmem>>, %arg3: memref<1x256xf32, #tpu.memory_space<vmem>>, %arg4: memref<1x256xf32, #tpu.memory_space<vmem>>, %arg5: memref<256x128xbf16, #tpu.memory_space<vmem>>, %arg6: memref<1x128xf32, #tpu.memory_space<vmem>>, %arg7: memref<16x256xbf16, #tpu.memory_space<vmem>>, %arg8: memref<16x128xf32, #tpu.memory_space<vmem>>) attributes {dimension_semantics = [#tpu.dimension_semantics<parallel>], iteration_bounds = array<i64: 2>, scalar_prefetch = 0 : i64, scratch_operands = 0 : i64, tpu.core_type = #tpu.core_type<tc>, window_params = [{transform_indices = @transform_0, window_bounds = array<i64: 16, 32>}, {pipeline_mode = #tpu.pipeline_mode<synchronous>, transform_indices = @transform_1, window_bounds = array<i64: 32, 256>}, {pipeline_mode = #tpu.pipeline_mode<synchronous>, transform_indices = @transform_2, window_bounds = array<i64: 1, 256>}, {pipeline_mode = #tpu.pipeline_mode<synchronous>, transform_indices = @transform_3, window_bounds = array<i64: 1, 256>}, {pipeline_mode = #tpu.pipeline_mode<synchronous>, transform_indices = @transform_4, window_bounds = array<i64: 256, 128>}, {pipeline_mode = #tpu.pipeline_mode<synchronous>, transform_indices = @transform_5, window_bounds = array<i64: 1, 128>}, {transform_indices = @transform_6, window_bounds = array<i64: 16, 256>}, {transform_indices = @transform_7, window_bounds = array<i64: 16, 128>}]} {
    %c0 = arith.constant 0 : index
    %c0_0 = arith.constant 0 : index
    %0 = vector.load %arg1[%c0, %c0_0] : memref<16x32xbf16, #tpu.memory_space<vmem>>, vector<16x32xbf16>
    %c0_1 = arith.constant 0 : index
    %c0_2 = arith.constant 0 : index
    %1 = vector.load %arg2[%c0_1, %c0_2] : memref<32x256xbf16, #tpu.memory_space<vmem>>, vector<32x256xbf16>
    %cst = arith.constant dense<0.000000e+00> : vector<16x256xf32>
    %2 = tpu.matmul %0, %1, %cst {dimension_numbers = #tpu.dot_dimension_numbers<[1], [0], [0], [1], [0, 0, 1, 1], [], []>} : vector<16x32xbf16>, vector<32x256xbf16>, vector<16x256xf32> -> vector<16x256xf32>
    %c0_3 = arith.constant 0 : index
    %c0_4 = arith.constant 0 : index
    %3 = vector.load %arg3[%c0_3, %c0_4] : memref<1x256xf32, #tpu.memory_space<vmem>>, vector<1x256xf32>
    %4 = vector.broadcast %3 : vector<1x256xf32> to vector<16x256xf32>
    %5 = arith.addf %2, %4 : vector<16x256xf32>
    %cst_5 = arith.constant 0.000000e+00 : f32
    %6 = vector.broadcast %cst_5 : f32 to vector<16x256xf32>
    %7 = arith.maximumf %5, %6 : vector<16x256xf32>
    %c0_6 = arith.constant 0 : index
    %c0_7 = arith.constant 0 : index
    %8 = vector.load %arg4[%c0_6, %c0_7] : memref<1x256xf32, #tpu.memory_space<vmem>>, vector<1x256xf32>
    %9 = vector.broadcast %8 : vector<1x256xf32> to vector<16x256xf32>
    %10 = arith.addf %7, %9 : vector<16x256xf32>
    %11 = arith.truncf %10 : vector<16x256xf32> to vector<16x256xbf16>
    %c0_8 = arith.constant 0 : index
    %c0_9 = arith.constant 0 : index
    %12 = vector.load %arg7[%c0_8, %c0_9] : memref<16x256xbf16, #tpu.memory_space<vmem>>, vector<16x256xbf16>
    tpu.vector_store %arg7[%c0_8, %c0_9], %11 {strides = array<i32>} : memref<16x256xbf16, #tpu.memory_space<vmem>>, vector<16x256xbf16>,
    %c0_10 = arith.constant 0 : index
    %c0_11 = arith.constant 0 : index
    %13 = vector.load %arg5[%c0_10, %c0_11] : memref<256x128xbf16, #tpu.memory_space<vmem>>, vector<256x128xbf16>
    %cst_12 = arith.constant dense<0.000000e+00> : vector<16x128xf32>
    %14 = tpu.matmul %11, %13, %cst_12 {dimension_numbers = #tpu.dot_dimension_numbers<[1], [0], [0], [1], [0, 0, 1, 1], [], []>} : vector<16x256xbf16>, vector<256x128xbf16>, vector<16x128xf32> -> vector<16x128xf32>
    %c0_13 = arith.constant 0 : index
    %c0_14 = arith.constant 0 : index
    %15 = vector.load %arg6[%c0_13, %c0_14] : memref<1x128xf32, #tpu.memory_space<vmem>>, vector<1x128xf32>
    %16 = vector.broadcast %15 : vector<1x128xf32> to vector<16x128xf32>
    %17 = arith.addf %14, %16 : vector<16x128xf32>
    %cst_15 = arith.constant dense<0xFF800000> : vector<16xf32>
    %18 = vector.multi_reduction <maximumf>, %17, %cst_15 [1] : vector<16x128xf32> to vector<16xf32>
    %19 = vector.shape_cast %18 : vector<16xf32> to vector<16x1xf32>
    %20 = vector.broadcast %19 : vector<16x1xf32> to vector<16x128xf32>
    %21 = arith.subf %17, %20 : vector<16x128xf32>
    %22 = math.exp %21 : vector<16x128xf32>
    %cst_16 = arith.constant dense<0.000000e+00> : vector<16xf32>
    %23 = vector.multi_reduction <add>, %22, %cst_16 [1] : vector<16x128xf32> to vector<16xf32>
    %24 = vector.shape_cast %23 : vector<16xf32> to vector<16x1xf32>
    %25 = tpu.reciprocal %24 {approx = true} : vector<16x1xf32> -> vector<16x1xf32>
    %26 = vector.broadcast %25 : vector<16x1xf32> to vector<16x128xf32>
    %27 = arith.mulf %22, %26 : vector<16x128xf32>
    %c0_17 = arith.constant 0 : index
    %c0_18 = arith.constant 0 : index
    %28 = vector.load %arg8[%c0_17, %c0_18] : memref<16x128xf32, #tpu.memory_space<vmem>>, vector<16x128xf32>
    tpu.vector_store %arg8[%c0_17, %c0_18], %27 {strides = array<i32>} : memref<16x128xf32, #tpu.memory_space<vmem>>, vector<16x128xf32>,
    return
  }
  func.func @transform_0(%arg0: i32) -> (i32, i32) {
    %c0_i32 = arith.constant 0 : i32
    %c0_i32_0 = arith.constant 0 : i32
    return %arg0, %c0_i32 : i32, i32
  }
  func.func @transform_1(%arg0: i32) -> (i32, i32) {
    %c0_i32 = arith.constant 0 : i32
    %c0_i32_0 = arith.constant 0 : i32
    %c0_i32_1 = arith.constant 0 : i32
    return %c0_i32, %c0_i32_0 : i32, i32
  }
  func.func @transform_2(%arg0: i32) -> (i32, i32) {
    %c0_i32 = arith.constant 0 : i32
    %c0_i32_0 = arith.constant 0 : i32
    %c0_i32_1 = arith.constant 0 : i32
    return %c0_i32, %c0_i32_0 : i32, i32
  }
  func.func @transform_3(%arg0: i32) -> (i32, i32) {
    %c0_i32 = arith.constant 0 : i32
    %c0_i32_0 = arith.constant 0 : i32
    %c0_i32_1 = arith.constant 0 : i32
    return %c0_i32, %c0_i32_0 : i32, i32
  }
  func.func @transform_4(%arg0: i32) -> (i32, i32) {
    %c0_i32 = arith.constant 0 : i32
    %c0_i32_0 = arith.constant 0 : i32
    %c0_i32_1 = arith.constant 0 : i32
    return %c0_i32, %c0_i32_0 : i32, i32
  }
  func.func @transform_5(%arg0: i32) -> (i32, i32) {
    %c0_i32 = arith.constant 0 : i32
    %c0_i32_0 = arith.constant 0 : i32
    %c0_i32_1 = arith.constant 0 : i32
    return %c0_i32, %c0_i32_0 : i32, i32
  }
  func.func @transform_6(%arg0: i32) -> (i32, i32) {
    %c0_i32 = arith.constant 0 : i32
    %c0_i32_0 = arith.constant 0 : i32
    return %arg0, %c0_i32 : i32, i32
  }
  func.func @transform_7(%arg0: i32) -> (i32, i32) {
    %c0_i32 = arith.constant 0 : i32
    %c0_i32_0 = arith.constant 0 : i32
    return %arg0, %c0_i32 : i32, i32
  }
}

module attributes {stable_mosaic.version = 11 : i64} {
  func.func @gdn_kernel(%arg0: i32, %arg1: memref<16x32xbf16, #tpu.memory_space<vmem>>, %arg2: memref<32x256xbf16, #tpu.memory_space<vmem>>, %arg3: memref<1x256xf32, #tpu.memory_space<vmem>>, %arg4: memref<1x256xf32, #tpu.memory_space<vmem>>, %arg5: memref<256x128xbf16, #tpu.memory_space<vmem>>, %arg6: memref<1x128xf32, #tpu.memory_space<vmem>>, %arg7: memref<16x256xbf16, #tpu.memory_space<vmem>>, %arg8: memref<16x128xf32, #tpu.memory_space<vmem>>) attributes {dimension_semantics = [#tpu.dimension_semantics<parallel>], iteration_bounds = array<i64: 2>, scalar_prefetch = 0 : i64, scratch_operands = 0 : i64, tpu.core_type = #tpu.core_type<tc>, window_params = [{transform_indices = @transform_0, window_bounds = array<i64: 16, 32>}, {pipeline_mode = #tpu.pipeline_mode<synchronous>, transform_indices = @transform_1, window_bounds = array<i64: 32, 256>}, {pipeline_mode = #tpu.pipeline_mode<synchronous>, transform_indices = @transform_2, window_bounds = array<i64: 1, 256>}, {pipeline_mode = #tpu.pipeline_mode<synchronous>, transform_indices = @transform_3, window_bounds = array<i64: 1, 256>}, {pipeline_mode = #tpu.pipeline_mode<synchronous>, transform_indices = @transform_4, window_bounds = array<i64: 256, 128>}, {pipeline_mode = #tpu.pipeline_mode<synchronous>, transform_indices = @transform_5, window_bounds = array<i64: 1, 128>}, {transform_indices = @transform_6, window_bounds = array<i64: 16, 256>}, {transform_indices = @transform_7, window_bounds = array<i64: 16, 128>}]} {
    %c0 = arith.constant 0 : index
    %c0_0 = arith.constant 0 : index
    %0 = vector.load %arg1[%c0, %c0_0] : memref<16x32xbf16, #tpu.memory_space<vmem>>, vector<16x32xbf16>
    %c0_1 = arith.constant 0 : index
    %c0_2 = arith.constant 0 : index
    %1 = vector.load %arg2[%c0_1, %c0_2] : memref<32x256xbf16, #tpu.memory_space<vmem>>, vector<32x256xbf16>
    %cst = arith.constant dense<0.000000e+00> : vector<16x256xf32>
    %2 = tpu.matmul %0, %1, %cst {dimension_numbers = #tpu.dot_dimension_numbers<[1], [0], [0], [1], [0, 0, 1, 1], [], []>} : vector<16x32xbf16>, vector<32x256xbf16>, vector<16x256xf32> -> vector<16x256xf32>
    %c0_3 = arith.constant 0 : index
    %c0_4 = arith.constant 0 : index
    %3 = vector.load %arg3[%c0_3, %c0_4] : memref<1x256xf32, #tpu.memory_space<vmem>>, vector<1x256xf32>
    %4 = vector.broadcast %3 : vector<1x256xf32> to vector<16x256xf32>
    %5 = arith.addf %2, %4 : vector<16x256xf32>
    %cst_5 = arith.constant 0.000000e+00 : f32
    %6 = vector.broadcast %cst_5 : f32 to vector<16x256xf32>
    %7 = arith.maximumf %5, %6 : vector<16x256xf32>
    %c0_6 = arith.constant 0 : index
    %c0_7 = arith.constant 0 : index
    %8 = vector.load %arg4[%c0_6, %c0_7] : memref<1x256xf32, #tpu.memory_space<vmem>>, vector<1x256xf32>
    %9 = vector.broadcast %8 : vector<1x256xf32> to vector<16x256xf32>
    %10 = arith.addf %7, %9 : vector<16x256xf32>
    %11 = arith.truncf %10 : vector<16x256xf32> to vector<16x256xbf16>
    %c0_8 = arith.constant 0 : index
    %c0_9 = arith.constant 0 : index
    %12 = vector.load %arg7[%c0_8, %c0_9] : memref<16x256xbf16, #tpu.memory_space<vmem>>, vector<16x256xbf16>
    tpu.vector_store %arg7[%c0_8, %c0_9], %11 {strides = array<i32>} : memref<16x256xbf16, #tpu.memory_space<vmem>>, vector<16x256xbf16>,
    %c0_10 = arith.constant 0 : index
    %c0_11 = arith.constant 0 : index
    %13 = vector.load %arg5[%c0_10, %c0_11] : memref<256x128xbf16, #tpu.memory_space<vmem>>, vector<256x128xbf16>
    %cst_12 = arith.constant dense<0.000000e+00> : vector<16x128xf32>
    %14 = tpu.matmul %11, %13, %cst_12 {dimension_numbers = #tpu.dot_dimension_numbers<[1], [0], [0], [1], [0, 0, 1, 1], [], []>} : vector<16x256xbf16>, vector<256x128xbf16>, vector<16x128xf32> -> vector<16x128xf32>
    %c0_13 = arith.constant 0 : index
    %c0_14 = arith.constant 0 : index
    %15 = vector.load %arg6[%c0_13, %c0_14] : memref<1x128xf32, #tpu.memory_space<vmem>>, vector<1x128xf32>
    %16 = vector.broadcast %15 : vector<1x128xf32> to vector<16x128xf32>
    %17 = arith.addf %14, %16 : vector<16x128xf32>
    %cst_15 = arith.constant dense<0xFF800000> : vector<16xf32>
    %18 = vector.multi_reduction <maximumf>, %17, %cst_15 [1] : vector<16x128xf32> to vector<16xf32>
    %19 = vector.shape_cast %18 : vector<16xf32> to vector<16x1xf32>
    %20 = vector.broadcast %19 : vector<16x1xf32> to vector<16x128xf32>
    %21 = arith.subf %17, %20 : vector<16x128xf32>
    %22 = math.exp %21 : vector<16x128xf32>
    %cst_16 = arith.constant dense<0.000000e+00> : vector<16xf32>
    %23 = vector.multi_reduction <add>, %22, %cst_16 [1] : vector<16x128xf32> to vector<16xf32>
    %24 = vector.shape_cast %23 : vector<16xf32> to vector<16x1xf32>
    %25 = tpu.reciprocal %24 {approx = true} : vector<16x1xf32> -> vector<16x1xf32>
    %26 = vector.broadcast %25 : vector<16x1xf32> to vector<16x128xf32>
    %27 = arith.mulf %22, %26 : vector<16x128xf32>
    %c0_17 = arith.constant 0 : index
    %c0_18 = arith.constant 0 : index
    %28 = vector.load %arg8[%c0_17, %c0_18] : memref<16x128xf32, #tpu.memory_space<vmem>>, vector<16x128xf32>
    tpu.vector_store %arg8[%c0_17, %c0_18], %27 {strides = array<i32>} : memref<16x128xf32, #tpu.memory_space<vmem>>, vector<16x128xf32>,
    return
  }
  func.func @transform_0(%arg0: i32) -> (i32, i32) {
    %c0_i32 = arith.constant 0 : i32
    %c0_i32_0 = arith.constant 0 : i32
    return %arg0, %c0_i32 : i32, i32
  }
  func.func @transform_1(%arg0: i32) -> (i32, i32) {
    %c0_i32 = arith.constant 0 : i32
    %c0_i32_0 = arith.constant 0 : i32
    %c0_i32_1 = arith.constant 0 : i32
    return %c0_i32, %c0_i32_0 : i32, i32
  }
  func.func @transform_2(%arg0: i32) -> (i32, i32) {
    %c0_i32 = arith.constant 0 : i32
    %c0_i32_0 = arith.constant 0 : i32
    %c0_i32_1 = arith.constant 0 : i32
    return %c0_i32, %c0_i32_0 : i32, i32
  }
  func.func @transform_3(%arg0: i32) -> (i32, i32) {
    %c0_i32 = arith.constant 0 : i32
    %c0_i32_0 = arith.constant 0 : i32
    %c0_i32_1 = arith.constant 0 : i32
    return %c0_i32, %c0_i32_0 : i32, i32
  }
  func.func @transform_4(%arg0: i32) -> (i32, i32) {
    %c0_i32 = arith.constant 0 : i32
    %c0_i32_0 = arith.constant 0 : i32
    %c0_i32_1 = arith.constant 0 : i32
    return %c0_i32, %c0_i32_0 : i32, i32
  }
  func.func @transform_5(%arg0: i32) -> (i32, i32) {
    %c0_i32 = arith.constant 0 : i32
    %c0_i32_0 = arith.constant 0 : i32
    %c0_i32_1 = arith.constant 0 : i32
    return %c0_i32, %c0_i32_0 : i32, i32
  }
  func.func @transform_6(%arg0: i32) -> (i32, i32) {
    %c0_i32 = arith.constant 0 : i32
    %c0_i32_0 = arith.constant 0 : i32
    return %arg0, %c0_i32 : i32, i32
  }
  func.func @transform_7(%arg0: i32) -> (i32, i32) {
    %c0_i32 = arith.constant 0 : i32
    %c0_i32_0 = arith.constant 0 : i32
    return %arg0, %c0_i32 : i32, i32
  }
}

</mosaic_0001>

<llo_original>
// kernel: tpu_custom_call.1
$region0: #{tpu_custom_call.1}
  #allocation0 [shape = 'u32[]', space=smem, size = 0x4, offset = 0x4, fixed_abs, tag = 'smem constant byte address 0x4 - core index']
  #allocation1 [shape = 'u32[72,128]{1,0:T(1,128)}', space=vmem, size = 0x9000, scoped, tag = 'internal scratch']
  %s0 = inlined_call_operand.hbm [shape: bf16[32,32], index: 0, kind: input, shape index: {}]
  %s1 = inlined_call_operand.hbm [shape: bf16[32,256], index: 1, kind: input, shape index: {}]
  %s2 = inlined_call_operand.hbm [shape: f32[1,256], index: 2, kind: input, shape index: {}]
  %s3 = inlined_call_operand.vmem [shape: f32[1,256], index: 3, kind: input, shape index: {}]
  %s4 = inlined_call_operand.hbm [shape: bf16[256,128], index: 4, kind: input, shape index: {}]
  %s5 = inlined_call_operand.vmem [shape: f32[1,128], index: 5, kind: input, shape index: {}]
  %s6 = inlined_call_operand.hbm [shape: bf16[32,256], index: 6, kind: output, shape index: {0}]
  %s7 = inlined_call_operand.hbm [shape: f32[32,128], index: 7, kind: output, shape index: {1}]
  %8 = xla_tuple %s6, %s7
  %s9 = sld [smem:[#allocation0]]
  $region81: #{tpu_custom_call.1} parent=0
    _
  %s11 = ssub.s32 1, %s9
  %s12 = scalar_select 0, %s11, %s9
  $region1: #{tpu_custom_call.1} parent=0
    #allocation2 [shape = 'u8[8192]{0}', space=vmem, size = 0x2000, scoped, tag = 'input window, operand 0']
    #allocation3 [shape = 's32[2]{0}', space=sflag, size = 0x8, scoped, tag = 'scoped memory for tpu_custom_call.1']
    #allocation4 [shape = 's32[2]{0}', space=sflag, size = 0x8, scoped, tag = 'scoped memory for tpu_custom_call.1']
    #allocation5 [shape = 'u8[16384]{0}', space=vmem, size = 0x4000, scoped, tag = 'input window, operand 1, single buffered']
    #allocation6 [shape = 's32[1]{0}', space=sflag, size = 0x4, scoped, tag = 'scoped memory for tpu_custom_call.1']
    #allocation7 [shape = 'u8[1024]{0}', space=vmem, size = 0x400, scoped, tag = 'input window, operand 2, single buffered']
    #allocation8 [shape = 'u8[65536]{0}', space=vmem, size = 0x10000, scoped, tag = 'input window, operand 4, single buffered']
    #allocation9 [shape = 's32[1]{0}', space=sflag, size = 0x4, scoped, tag = 'scoped memory for tpu_custom_call.1']
    #allocation10 [shape = 'u8[16384]{0}', space=vmem, size = 0x4000, scoped, tag = 'output window, operand 0']
    #allocation11 [shape = 'u8[16384]{0}', space=vmem, size = 0x4000, scoped, tag = 'output window, operand 1']
    #allocation12 [shape = 's32[2]{0}', space=sflag, size = 0x8, scoped, tag = 'scoped memory for tpu_custom_call.1']
    %13 = vsyncpa [#allocation3], 0
    %s14 = scalar_lea.sflag [#allocation3], 1
    %15 = vsyncpa %s14, 0
    %16 = vsyncpa [#allocation6], 0
    %17 = vsyncpa [#allocation9], 0
    %18 = vsyncpa [#allocation4], 0
    %s19 = scalar_lea.sflag [#allocation4], 1
    %20 = vsyncpa %s19, 0
    %21 = vsyncpa [#allocation12], 0
    %s22 = scalar_lea.sflag [#allocation12], 1
    %23 = vsyncpa %s22, 0
    loop: start=0, step=1, limit=4
    $region2: #{tpu_custom_call.1} parent=1 // loop_pre_header
      _
    $region3: #{tpu_custom_call.1} parent=1 // loop_header
      %s25 = sphi 0, %s29
      %p26 = scmp.ge.s32.totalorder %s25, 4
      %s35 = sphi 0, %s37
      %s38 = sphi 0, %s35
      %s39 = sphi 0, %s38
      %s55 = sphi 0, %s39
      %s59 = sphi 0, %s59
      %s61 = sphi 0, %s59
      %s62 = sphi 0, %s61
      %s76 = sphi 0, %s62
      %s80 = sphi 0, %s80
      %s82 = sphi 0, %s80
      %s83 = sphi 0, %s82
      %s97 = sphi 0, %s83
      %s101 = sphi 0, %s101
      %s103 = sphi 0, %s101
      %s104 = sphi 0, %s103
      %s118 = sphi 0, %s104
      %s122 = sphi 0, %s122
      %s124 = sphi 0, %s122
      %s125 = sphi 0, %s124
      %s139 = sphi 0, %s125
      %s143 = sphi 0, %s143
      %s145 = sphi 0, %s143
      %s146 = sphi 0, %s145
      %s160 = sphi 0, %s146
      %s166 = sphi 0, %s168
      %s169 = sphi 0, %s166
      %s170 = sphi 0, %s169
      %s186 = sphi 0, %s170
      %s192 = sphi 0, %s194
      %s195 = sphi 0, %s192
      %s196 = sphi 0, %s195
      %s212 = sphi 0, %s196
    $region4: #{tpu_custom_call.1} parent=1 // loop_header_branch
      %28 = sbr.rel (%p26) target = $region8
    $region5: #{tpu_custom_call.1} parent=1 // loop_body
      %s30 = ssub.s32 %s25, 1
      %s31 = ssub.s32 %s25, 2
      %s32 = sadd.s32 %s25, 1
      %s33 = ssub.s32 %s25, %s32
      %p34 = scmp.eq.s32.totalorder %s33, 0
      %s36 = sadd.s32 %s35, 1
      %s37 = scalar_select %p34, %s35, %s36
      %p40 = pneg %p34
      %p41 = scmp.eq.s32.totalorder %s25, 1
      %p42 = por %p40, %p41
      %p43 = scmp.ne.s32.totalorder %s35, %s38
      %p44 = scmp.eq.s32.totalorder %s25, 0
      %p45 = por %p43, %p44
      %p46 = scmp.ne.s32.totalorder %s35, %s38
      %p47 = scmp.eq.s32.totalorder %s30, 1
      %p48 = por %p46, %p47
      %p49 = scmp.ne.s32.totalorder %s38, %s39
      %p50 = scmp.eq.s32.totalorder %s30, 0
      %p51 = por %p49, %p50
      %p52 = scmp.ne.s32.totalorder %s38, %s39
      %p53 = scmp.eq.s32.totalorder %s31, 1
      %p54 = por %p52, %p53
      %p56 = scmp.ne.s32.totalorder %s39, %s55
      %p57 = scmp.eq.s32.totalorder %s31, 0
      %p58 = por %p56, %p57
      %s60 = sadd.s32 %s59, 1
      %p63 = scmp.eq.s32.totalorder %s25, 1
      %p64 = scmp.ne.s32.totalorder %s59, %s61
      %p65 = scmp.eq.s32.totalorder %s25, 0
      %p66 = por %p64, %p65
      %p67 = scmp.ne.s32.totalorder %s59, %s61
      %p68 = scmp.eq.s32.totalorder %s30, 1
      %p69 = por %p67, %p68
      %p70 = scmp.ne.s32.totalorder %s61, %s62
      %p71 = scmp.eq.s32.totalorder %s30, 0
      %p72 = por %p70, %p71
      %p73 = scmp.ne.s32.totalorder %s61, %s62
      %p74 = scmp.eq.s32.totalorder %s31, 1
      %p75 = por %p73, %p74
      %p77 = scmp.ne.s32.totalorder %s62, %s76
      %p78 = scmp.eq.s32.totalorder %s31, 0
      %p79 = por %p77, %p78
      %s81 = sadd.s32 %s80, 1
      %p84 = scmp.eq.s32.totalorder %s25, 1
      %p85 = scmp.ne.s32.totalorder %s80, %s82
      %p86 = scmp.eq.s32.totalorder %s25, 0
      %p87 = por %p85, %p86
      %p88 = scmp.ne.s32.totalorder %s80, %s82
      %p89 = scmp.eq.s32.totalorder %s30, 1
      %p90 = por %p88, %p89
      %p91 = scmp.ne.s32.totalorder %s82, %s83
      %p92 = scmp.eq.s32.totalorder %s30, 0
      %p93 = por %p91, %p92
      %p94 = scmp.ne.s32.totalorder %s82, %s83
      %p95 = scmp.eq.s32.totalorder %s31, 1
      %p96 = por %p94, %p95
      %p98 = scmp.ne.s32.totalorder %s83, %s97
      %p99 = scmp.eq.s32.totalorder %s31, 0
      %p100 = por %p98, %p99
      %s102 = sadd.s32 %s101, 1
      %p105 = scmp.eq.s32.totalorder %s25, 1
      %p106 = scmp.ne.s32.totalorder %s101, %s103
      %p107 = scmp.eq.s32.totalorder %s25, 0
      %p108 = por %p106, %p107
      %p109 = scmp.ne.s32.totalorder %s101, %s103
      %p110 = scmp.eq.s32.totalorder %s30, 1
      %p111 = por %p109, %p110
      %p112 = scmp.ne.s32.totalorder %s103, %s104
      %p113 = scmp.eq.s32.totalorder %s30, 0
      %p114 = por %p112, %p113
      %p115 = scmp.ne.s32.totalorder %s103, %s104
      %p116 = scmp.eq.s32.totalorder %s31, 1
      %p117 = por %p115, %p116
      %p119 = scmp.ne.s32.totalorder %s104, %s118
      %p120 = scmp.eq.s32.totalorder %s31, 0
      %p121 = por %p119, %p120
      %s123 = sadd.s32 %s122, 1
      %p126 = scmp.eq.s32.totalorder %s25, 1
      %p127 = scmp.ne.s32.totalorder %s122, %s124
      %p128 = scmp.eq.s32.totalorder %s25, 0
      %p129 = por %p127, %p128
      %p130 = scmp.ne.s32.totalorder %s122, %s124
      %p131 = scmp.eq.s32.totalorder %s30, 1
      %p132 = por %p130, %p131
      %p133 = scmp.ne.s32.totalorder %s124, %s125
      %p134 = scmp.eq.s32.totalorder %s30, 0
      %p135 = por %p133, %p134
      %p136 = scmp.ne.s32.totalorder %s124, %s125
      %p137 = scmp.eq.s32.totalorder %s31, 1
      %p138 = por %p136, %p137
      %p140 = scmp.ne.s32.totalorder %s125, %s139
      %p141 = scmp.eq.s32.totalorder %s31, 0
      %p142 = por %p140, %p141
      %s144 = sadd.s32 %s143, 1
      %p147 = scmp.eq.s32.totalorder %s25, 1
      %p148 = scmp.ne.s32.totalorder %s143, %s145
      %p149 = scmp.eq.s32.totalorder %s25, 0
      %p150 = por %p148, %p149
      %p151 = scmp.ne.s32.totalorder %s143, %s145
      %p152 = scmp.eq.s32.totalorder %s30, 1
      %p153 = por %p151, %p152
      %p154 = scmp.ne.s32.totalorder %s145, %s146
      %p155 = scmp.eq.s32.totalorder %s30, 0
      %p156 = por %p154, %p155
      %p157 = scmp.ne.s32.totalorder %s145, %s146
      %p158 = scmp.eq.s32.totalorder %s31, 1
      %p159 = por %p157, %p158
      %p161 = scmp.ne.s32.totalorder %s146, %s160
      %p162 = scmp.eq.s32.totalorder %s31, 0
      %p163 = por %p161, %p162
      %s164 = ssub.s32 %s25, %s32
      %p165 = scmp.eq.s32.totalorder %s164, 0
      %s167 = sadd.s32 %s166, 1
      %s168 = scalar_select %p165, %s166, %s167
      %p171 = pneg %p165
      %p172 = scmp.eq.s32.totalorder %s25, 1
      %p173 = por %p171, %p172
      %p174 = scmp.ne.s32.totalorder %s166, %s169
      %p175 = scmp.eq.s32.totalorder %s25, 0
      %p176 = por %p174, %p175
      %p177 = scmp.ne.s32.totalorder %s166, %s169
      %p178 = scmp.eq.s32.totalorder %s30, 1
      %p179 = por %p177, %p178
      %p180 = scmp.ne.s32.totalorder %s169, %s170
      %p181 = scmp.eq.s32.totalorder %s30, 0
      %p182 = por %p180, %p181
      %p183 = scmp.ne.s32.totalorder %s169, %s170
      %p184 = scmp.eq.s32.totalorder %s31, 1
      %p185 = por %p183, %p184
      %p187 = scmp.ne.s32.totalorder %s170, %s186
      %p188 = scmp.eq.s32.totalorder %s31, 0
      %p189 = por %p187, %p188
      %s190 = ssub.s32 %s25, %s32
      %p191 = scmp.eq.s32.totalorder %s190, 0
      %s193 = sadd.s32 %s192, 1
      %s194 = scalar_select %p191, %s192, %s193
      %p197 = pneg %p191
      %p198 = scmp.eq.s32.totalorder %s25, 1
      %p199 = por %p197, %p198
      %p200 = scmp.ne.s32.totalorder %s192, %s195
      %p201 = scmp.eq.s32.totalorder %s25, 0
      %p202 = por %p200, %p201
      %p203 = scmp.ne.s32.totalorder %s192, %s195
      %p204 = scmp.eq.s32.totalorder %s30, 1
      %p205 = por %p203, %p204
      %p206 = scmp.ne.s32.totalorder %s195, %s196
      %p207 = scmp.eq.s32.totalorder %s30, 0
      %p208 = por %p206, %p207
      %p209 = scmp.ne.s32.totalorder %s195, %s196
      %p210 = scmp.eq.s32.totalorder %s31, 1
      %p211 = por %p209, %p210
      %p213 = scmp.ne.s32.totalorder %s196, %s212
      %p214 = scmp.eq.s32.totalorder %s31, 0
      %p215 = por %p213, %p214
      %p216 = scmp.le.s32.totalorder 1, %s25
      %p217 = scmp.lt.s32.totalorder %s25, 3
      %p218 = pnand %p216, %p217
      %p219 = pneg %p218
      // Predicated region
      $region9: #{tpu_custom_call.1} parent=5 // pred_check
        _
      $region10: #{tpu_custom_call.1} parent=5 // pred_check_branch
        %221 = sbr.rel (%p218) target = $region12
      $region11: #{tpu_custom_call.1} parent=5 // pred_region
        %s222 = ssub.s32 %s25, 1
        // Predicated region
        $region13: #{tpu_custom_call.1} parent=11 // pred_check
          %p223 = pneg %p72
        $region14: #{tpu_custom_call.1} parent=11 // pred_check_branch
          %225 = sbr.rel (%p223) target = $region16
        $region15: #{tpu_custom_call.1} parent=11 // pred_region
          %227 = vsyncadd [#allocation6], 0
          %s228 = sshll.u32 %s1, 4
          %s229 = int_to_ptr.hbm [resolvable:$true] %s228
          %s230 = sshll.u32 [#allocation5], 4
          %s231 = int_to_ptr.vmem [resolvable:$true] %s230
          %236 = dma.hbm_to_vmem [thread:$0]  %s229, 512, %s231, [#allocation6], 128, 128, 8
        $region16: #{tpu_custom_call.1} parent=11 // pred_fallthru
          _
        // Predicated region
        $region17: #{tpu_custom_call.1} parent=11 // pred_check
          %p237 = pneg %p93
        $region18: #{tpu_custom_call.1} parent=11 // pred_check_branch
          %239 = sbr.rel (%p237) target = $region20
        $region19: #{tpu_custom_call.1} parent=11 // pred_region
          %241 = vsyncadd [#allocation6], 0
          %s243 = sshll.u32 %s2, 4
          %s244 = int_to_ptr.hbm [resolvable:$true] %s243
          %s245 = sshll.u32 [#allocation7], 4
          %s246 = int_to_ptr.vmem [resolvable:$true] %s245
          %248 = dma.hbm_to_vmem [thread:$0]  %s244, 32, %s246, [#allocation6]
        $region20: #{tpu_custom_call.1} parent=11 // pred_fallthru
          _
        // Predicated region
        $region21: #{tpu_custom_call.1} parent=11 // pred_check
          %p249 = pneg %p114
        $region22: #{tpu_custom_call.1} parent=11 // pred_check_branch
          %251 = sbr.rel (%p249) target = $region24
        $region23: #{tpu_custom_call.1} parent=11 // pred_region
          _
        $region24: #{tpu_custom_call.1} parent=11 // pred_fallthru
          _
        // Predicated region
        $region25: #{tpu_custom_call.1} parent=11 // pred_check
          %p252 = pneg %p135
        $region26: #{tpu_custom_call.1} parent=11 // pred_check_branch
          %254 = sbr.rel (%p252) target = $region28
        $region27: #{tpu_custom_call.1} parent=11 // pred_region
          %256 = vsyncadd [#allocation9], 0
          %s257 = sshll.u32 %s4, 4
          %s258 = int_to_ptr.hbm [resolvable:$true] %s257
          %s259 = sshll.u32 [#allocation8], 4
          %s260 = int_to_ptr.vmem [resolvable:$true] %s259
          %265 = dma.hbm_to_vmem [thread:$0]  %s258, 2048, %s260, [#allocation9], 64, 64, 4
        $region28: #{tpu_custom_call.1} parent=11 // pred_fallthru
          _
        // Predicated region
        $region29: #{tpu_custom_call.1} parent=11 // pred_check
          %p266 = pneg %p156
        $region30: #{tpu_custom_call.1} parent=11 // pred_check_branch
          %268 = sbr.rel (%p266) target = $region32
        $region31: #{tpu_custom_call.1} parent=11 // pred_region
          _
        $region32: #{tpu_custom_call.1} parent=11 // pred_fallthru
          _
      $region12: #{tpu_custom_call.1} parent=5 // pred_fallthru
        _
      %p269 = scmp.lt.s32.totalorder %s25, 2
      // Predicated region
      $region33: #{tpu_custom_call.1} parent=5 // pred_check
        %p270 = pneg %p269
      $region34: #{tpu_custom_call.1} parent=5 // pred_check_branch
        %272 = sbr.rel (%p270) target = $region36
      $region35: #{tpu_custom_call.1} parent=5 // pred_region
        // Predicated region
        $region37: #{tpu_custom_call.1} parent=35 // pred_check
          %p273 = pneg %p45
        $region38: #{tpu_custom_call.1} parent=35 // pred_check_branch
          %275 = sbr.rel (%p273) target = $region40
        $region39: #{tpu_custom_call.1} parent=35 // pred_region
          %s276 = sand.u32 %s35, 1
          %s277 = scalar_lea.sflag [#allocation3], %s276
          %s278 = sand.u32 %s35, 1
          %s279 = smul.addr %s278, 8
          %s280 = scalar_lea.vmem [#allocation2], %s279
          %s281 = smul.u32 2, %s25
          %283 = vsyncadd %s277, 0
          %s284 = smul.addr %s281, 4
          %s285 = scalar_lea.hbm %s0, %s284
          %s286 = sshll.u32 %s285, 4
          %s287 = int_to_ptr.hbm [resolvable:$true] %s286
          %s288 = sshll.u32 %s280, 4
          %s289 = int_to_ptr.vmem [resolvable:$true] %s288
          %294 = dma.hbm_to_vmem [thread:$0]  %s287, 128, %s289, %s277, 64, 64, 4
        $region40: #{tpu_custom_call.1} parent=35 // pred_fallthru
          _
      $region36: #{tpu_custom_call.1} parent=5 // pred_fallthru
        _
      %p295 = scmp.le.s32.totalorder 1, %s25
      %p296 = scmp.lt.s32.totalorder %s25, 3
      %p297 = pnand %p295, %p296
      %p298 = pneg %p297
      // Predicated region
      $region41: #{tpu_custom_call.1} parent=5 // pred_check
        _
      $region42: #{tpu_custom_call.1} parent=5 // pred_check_branch
        %300 = sbr.rel (%p297) target = $region44
      $region43: #{tpu_custom_call.1} parent=5 // pred_region
        %s301 = ssub.s32 %s25, 1
        %s302 = sand.u32 %s38, 1
        %s303 = scalar_lea.sflag [#allocation3], %s302
        %s304 = sand.u32 %s38, 1
        %s305 = smul.addr %s304, 8
        %s306 = scalar_lea.vmem [#allocation2], %s305
        // Predicated region
        $region45: #{tpu_custom_call.1} parent=43 // pred_check
          %p307 = pneg %p51
        $region46: #{tpu_custom_call.1} parent=43 // pred_check_branch
          %309 = sbr.rel (%p307) target = $region48
        $region47: #{tpu_custom_call.1} parent=43 // pred_region
          %311 = dma.done %s303, 128
        $region48: #{tpu_custom_call.1} parent=43 // pred_fallthru
          _
        // Predicated region
        $region49: #{tpu_custom_call.1} parent=43 // pred_check
          %p312 = pneg %p72
        $region50: #{tpu_custom_call.1} parent=43 // pred_check_branch
          %314 = sbr.rel (%p312) target = $region52
        $region51: #{tpu_custom_call.1} parent=43 // pred_region
          %316 = dma.done [#allocation6], 512
        $region52: #{tpu_custom_call.1} parent=43 // pred_fallthru
          _
        // Predicated region
        $region53: #{tpu_custom_call.1} parent=43 // pred_check
          %p317 = pneg %p93
        $region54: #{tpu_custom_call.1} parent=43 // pred_check_branch
          %319 = sbr.rel (%p317) target = $region56
        $region55: #{tpu_custom_call.1} parent=43 // pred_region
          %321 = dma.done [#allocation6], 32
        $region56: #{tpu_custom_call.1} parent=43 // pred_fallthru
          _
        // Predicated region
        $region57: #{tpu_custom_call.1} parent=43 // pred_check
          %p322 = pneg %p135
        $region58: #{tpu_custom_call.1} parent=43 // pred_check_branch
          %324 = sbr.rel (%p322) target = $region60
        $region59: #{tpu_custom_call.1} parent=43 // pred_region
          %326 = dma.done [#allocation9], 2048
        $region60: #{tpu_custom_call.1} parent=43 // pred_fallthru
          _
        %s327 = sand.u32 %s38, 1
        %s328 = scalar_lea.sflag [#allocation3], %s327
        %s329 = sand.u32 %s38, 1
        %s330 = smul.addr %s329, 8
        %s331 = scalar_lea.vmem [#allocation2], %s330
        %p332 = pneg %p51
        %p333 = pneg %p48
        %p334 = pneg %p72
        %p335 = pneg %p69
        %p336 = pneg %p93
        %p337 = pneg %p90
        %p338 = pneg %p114
        %p339 = pneg %p111
        %p340 = pneg %p135
        %p341 = pneg %p132
        %p342 = pneg %p156
        %p343 = pneg %p153
        %p344 = pneg %p182
        %p345 = pneg %p179
        %s346 = sand.u32 %s169, 1
        %s347 = scalar_lea.sflag [#allocation4], %s346
        %s348 = sand.u32 %s169, 1
        %s349 = smul.addr %s348, 16
        %s350 = scalar_lea.vmem [#allocation10], %s349
        %p351 = pneg %p208
        %p352 = pneg %p205
        %s353 = sand.u32 %s195, 1
        %s354 = scalar_lea.sflag [#allocation12], %s353
        %s355 = sand.u32 %s195, 1
        %s356 = smul.addr %s355, 16
        %s357 = scalar_lea.vmem [#allocation11], %s356
        %s358 = smul.u32 2, %s30
        %s359 = smul.u32 2, %s30
        %s360 = smul.u32 2, %s30
        %v362 = vld [vmem:[%s306] sm:$0xf]
        %v363 = vld [vmem:[%s306 + $0x4] sm:$0xf]
        %v364 = vld [vmem:[#allocation5] sm:$0xff]
        %v365 = vld [vmem:[#allocation5 + $0x8] sm:$0xff]
        %v366 = vld [vmem:[#allocation5 + $0x10] sm:$0xff]
        %v367 = vld [vmem:[#allocation5 + $0x18] sm:$0xff]
        %v368 = vld [vmem:[#allocation7] sm:$0x3]
        %v370 = vperm.slane %v368, 0
        %v371 = vperm.slane %v368, 1
        %v376 = vunpack.c.l.b16 %v362
        %v377 = vunpack.c.l.b16 %v363
        %v378 = vpack.c.b16 %v377, %v376
        %v383 = vunpack.c.l.b16 %v364
        %v384 = vunpack.c.h.b16 %v364
        %v385 = vunpack.c.l.b16 %v365
        %v386 = vunpack.c.h.b16 %v365
        %v387 = vunpack.c.l.b16 %v366
        %v388 = vunpack.c.h.b16 %v366
        %v389 = vunpack.c.l.b16 %v367
        %v390 = vunpack.c.h.b16 %v367
        %v391 = vpack.c.b16 %v385, %v383
        %v392 = vpack.c.b16 %v386, %v384
        %v393 = vpack.c.b16 %v389, %v387
        %v394 = vpack.c.b16 %v390, %v388
        %vm399 = vcmask 261120
        %v401 = vsel %vm399, %v378, 0
        %403 = vmatpush.bf16.msra.mxu0 0
        %404 = vmatpush.bf16.msra.mxu0 0
        %405 = vmatpush.bf16.msra.mxu0 0
        %406 = vmatpush.bf16.msra.mxu0 0
        %407 = vmatpush.bf16.msra.mxu0 0
        %408 = vmatpush.bf16.msra.mxu0 0
        %409 = vmatpush.bf16.msra.mxu0 %v393
        %410 = vmatpush.bf16.msra.mxu0 %v391
        %411 = vmatmul.bf16.gmra.mxu0 %v401
        %v412 = vpop.f32.mrf.mxu0
        %v413 = vadd.f32 %v370, %v412
        %v414 = vpop.f32.mrf.mxu0
        %v415 = vadd.f32 %v370, %v414
        %416 = vdwg.mxu0
        %417 = vmatpush.bf16.msra.mxu0 0
        %418 = vmatpush.bf16.msra.mxu0 0
        %419 = vmatpush.bf16.msra.mxu0 0
        %420 = vmatpush.bf16.msra.mxu0 0
        %421 = vmatpush.bf16.msra.mxu0 0
        %422 = vmatpush.bf16.msra.mxu0 0
        %423 = vmatpush.bf16.msra.mxu0 %v394
        %424 = vmatpush.bf16.msra.mxu0 %v392
        %425 = vmatmul.bf16.gmra.mxu0 %v401
        %v426 = vpop.f32.mrf.mxu0
        %v427 = vadd.f32 %v371, %v426
        %v428 = vpop.f32.mrf.mxu0
        %v429 = vadd.f32 %v371, %v428
        %430 = vdwg.mxu0
        %v431 = vmax.f32 %v413, 0.0
        %v432 = vmax.f32 %v427, 0.0
        %v433 = vmax.f32 %v415, 0.0
        %v434 = vmax.f32 %v429, 0.0
        %v435 = vld [vmem:[%s3] sm:$0x3]
        %v437 = vperm.slane %v435, 0
        %v438 = vperm.slane %v435, 1
        %v441 = vadd.f32 %v431, %v437
        %v442 = vadd.f32 %v432, %v438
        %v443 = vadd.f32 %v433, %v437
        %v444 = vadd.f32 %v434, %v438
        %v445 = vpack.c.bf16 %v442, %v441
        %v446 = vpack.c.bf16 %v444, %v443
        %447 = vst [vmem:[%s350] sm:$0xff] %v445
        %448 = vst [vmem:[%s350 + $0x8] sm:$0xff] %v446
        %v449 = vld [vmem:[#allocation8] sm:$0xf]
        %v450 = vld [vmem:[#allocation8 + $0x4] sm:$0xf]
        %v451 = vld [vmem:[#allocation8 + $0x8] sm:$0xf]
        %v452 = vld [vmem:[#allocation8 + $0xc] sm:$0xf]
        %v453 = vld [vmem:[#allocation8 + $0x10] sm:$0xf]
        %v454 = vld [vmem:[#allocation8 + $0x14] sm:$0xf]
        %v455 = vld [vmem:[#allocation8 + $0x18] sm:$0xf]
        %v456 = vld [vmem:[#allocation8 + $0x1c] sm:$0xf]
        %v457 = vld [vmem:[#allocation8 + $0x20] sm:$0xf]
        %v458 = vld [vmem:[#allocation8 + $0x24] sm:$0xf]
        %v459 = vld [vmem:[#allocation8 + $0x28] sm:$0xf]
        %v460 = vld [vmem:[#allocation8 + $0x2c] sm:$0xf]
        %v461 = vld [vmem:[#allocation8 + $0x30] sm:$0xf]
        %v462 = vld [vmem:[#allocation8 + $0x34] sm:$0xf]
        %v463 = vld [vmem:[#allocation8 + $0x38] sm:$0xf]
        %v464 = vld [vmem:[#allocation8 + $0x3c] sm:$0xf]
        %v465 = vld [vmem:[#allocation8 + $0x40] sm:$0xf]
        %v466 = vld [vmem:[#allocation8 + $0x44] sm:$0xf]
        %v467 = vld [vmem:[#allocation8 + $0x48] sm:$0xf]
        %v468 = vld [vmem:[#allocation8 + $0x4c] sm:$0xf]
        %v469 = vld [vmem:[#allocation8 + $0x50] sm:$0xf]
        %v470 = vld [vmem:[#allocation8 + $0x54] sm:$0xf]
        %v471 = vld [vmem:[#allocation8 + $0x58] sm:$0xf]
        %v472 = vld [vmem:[#allocation8 + $0x5c] sm:$0xf]
        %v473 = vld [vmem:[#allocation8 + $0x60] sm:$0xf]
        %v474 = vld [vmem:[#allocation8 + $0x64] sm:$0xf]
        %v475 = vld [vmem:[#allocation8 + $0x68] sm:$0xf]
        %v476 = vld [vmem:[#allocation8 + $0x6c] sm:$0xf]
        %v477 = vld [vmem:[#allocation8 + $0x70] sm:$0xf]
        %v478 = vld [vmem:[#allocation8 + $0x74] sm:$0xf]
        %v479 = vld [vmem:[#allocation8 + $0x78] sm:$0xf]
        %v480 = vld [vmem:[#allocation8 + $0x7c] sm:$0xf]
        %v481 = vld [vmem:[%s5] sm:$0x1]
        %v483 = vperm.slane %v481, 0
        %v487 = vunpack.c.l.b16 %v445
        %v488 = vunpack.c.h.b16 %v445
        %v489 = vunpack.c.l.b16 %v446
        %v490 = vunpack.c.h.b16 %v446
        %v491 = vpack.c.b16 %v489, %v487
        %v492 = vpack.c.b16 %v490, %v488
        %v527 = vunpack.c.l.b16 %v449
        %v528 = vunpack.c.l.b16 %v450
        %v529 = vunpack.c.l.b16 %v451
        %v530 = vunpack.c.l.b16 %v452
        %v531 = vunpack.c.l.b16 %v453
        %v532 = vunpack.c.l.b16 %v454
        %v533 = vunpack.c.l.b16 %v455
        %v534 = vunpack.c.l.b16 %v456
        %v535 = vunpack.c.l.b16 %v457
        %v536 = vunpack.c.l.b16 %v458
        %v537 = vunpack.c.l.b16 %v459
        %v538 = vunpack.c.l.b16 %v460
        %v539 = vunpack.c.l.b16 %v461
        %v540 = vunpack.c.l.b16 %v462
        %v541 = vunpack.c.l.b16 %v463
        %v542 = vunpack.c.l.b16 %v464
        %v543 = vunpack.c.l.b16 %v465
        %v544 = vunpack.c.l.b16 %v466
        %v545 = vunpack.c.l.b16 %v467
        %v546 = vunpack.c.l.b16 %v468
        %v547 = vunpack.c.l.b16 %v469
        %v548 = vunpack.c.l.b16 %v470
        %v549 = vunpack.c.l.b16 %v471
        %v550 = vunpack.c.l.b16 %v472
        %v551 = vunpack.c.l.b16 %v473
        %v552 = vunpack.c.l.b16 %v474
        %v553 = vunpack.c.l.b16 %v475
        %v554 = vunpack.c.l.b16 %v476
        %v555 = vunpack.c.l.b16 %v477
        %v556 = vunpack.c.l.b16 %v478
        %v557 = vunpack.c.l.b16 %v479
        %v558 = vunpack.c.l.b16 %v480
        %v559 = vpack.c.b16 %v528, %v527
        %v560 = vpack.c.b16 %v530, %v529
        %v561 = vpack.c.b16 %v532, %v531
        %v562 = vpack.c.b16 %v534, %v533
        %v563 = vpack.c.b16 %v536, %v535
        %v564 = vpack.c.b16 %v538, %v537
        %v565 = vpack.c.b16 %v540, %v539
        %v566 = vpack.c.b16 %v542, %v541
        %v567 = vpack.c.b16 %v544, %v543
        %v568 = vpack.c.b16 %v546, %v545
        %v569 = vpack.c.b16 %v548, %v547
        %v570 = vpack.c.b16 %v550, %v549
        %v571 = vpack.c.b16 %v552, %v551
        %v572 = vpack.c.b16 %v554, %v553
        %v573 = vpack.c.b16 %v556, %v555
        %v574 = vpack.c.b16 %v558, %v557
        %591 = vmatpush.bf16.msra.mxu0 %v566
        %592 = vmatpush.bf16.msra.mxu0 %v565
        %593 = vmatpush.bf16.msra.mxu0 %v564
        %594 = vmatpush.bf16.msra.mxu0 %v563
        %595 = vmatpush.bf16.msra.mxu0 %v562
        %596 = vmatpush.bf16.msra.mxu0 %v561
        %597 = vmatpush.bf16.msra.mxu0 %v560
        %598 = vmatpush.bf16.msra.mxu0 %v559
        %599 = vmatmul.bf16.gmra.mxu0 %v491
        %v600 = vpop.f32.mrf.mxu0
        %v601 = vadd.f32 %v483, %v600
        %v602 = vpop.f32.mrf.mxu0
        %v603 = vadd.f32 %v483, %v602
        %604 = vdwg.mxu0
        %605 = vmatpush.bf16.msra.mxu0 %v574
        %606 = vmatpush.bf16.msra.mxu0 %v573
        %607 = vmatpush.bf16.msra.mxu0 %v572
        %608 = vmatpush.bf16.msra.mxu0 %v571
        %609 = vmatpush.bf16.msra.mxu0 %v570
        %610 = vmatpush.bf16.msra.mxu0 %v569
        %611 = vmatpush.bf16.msra.mxu0 %v568
        %612 = vmatpush.bf16.msra.mxu0 %v567
        %613 = vmatmul.bf16.gmra.mxu0 %v492
        %v614 = vpop.f32.mrf.mxu0
        %v615 = vadd.f32 %v601, %v614
        %v616 = vpop.f32.mrf.mxu0
        %v617 = vadd.f32 %v603, %v616
        %618 = vdwg.mxu0
        %619 = vmax.xlane.f32.xlu0 %v615
        %v620 = vpop.xlane.xlu0 %619
        %621 = vmax.xlane.f32.xlu0 %v617
        %v622 = vpop.xlane.xlu0 %621
        %v623 = vsub.f32 %v615, %v620
        %v624 = vsub.f32 %v617, %v622
        %v625 = vmul.f32 %v623, 1.442695
        %v626 = vpow.pop %v625
        %v627 = vmul.f32 %v624, 1.442695
        %v628 = vpow.pop %v627
        %629 = vadd.xlane.f32.xlu0 %v626
        %v630 = vpop.xlane.xlu0 %629
        %631 = vadd.xlane.f32.xlu0 %v628
        %v632 = vpop.xlane.xlu0 %631
        %v633 = vrcp.pop %v630
        %v634 = vrcp.pop %v632
        %v635 = vmul.f32 %v626, %v633
        %v636 = vmul.f32 %v628, %v634
        %637 = vst [vmem:[%s357] sm:$0xff] %v635
        %638 = vst [vmem:[%s357 + $0x8] sm:$0xff] %v636
        %s639 = sand.u32 %s169, 1
        %s640 = scalar_lea.sflag [#allocation4], %s639
        %s641 = sand.u32 %s169, 1
        %s642 = smul.addr %s641, 16
        %s643 = scalar_lea.vmem [#allocation10], %s642
        %s644 = sand.u32 %s195, 1
        %s645 = scalar_lea.sflag [#allocation12], %s644
        %s646 = sand.u32 %s195, 1
        %s647 = smul.addr %s646, 16
        %s648 = scalar_lea.vmem [#allocation11], %s647
        // Predicated region
        $region61: #{tpu_custom_call.1} parent=43 // pred_check
          %p649 = pneg %p179
        $region62: #{tpu_custom_call.1} parent=43 // pred_check_branch
          %651 = sbr.rel (%p649) target = $region64
        $region63: #{tpu_custom_call.1} parent=43 // pred_region
          %s652 = smul.u32 2, %s30
          %654 = vsyncadd %s640, 0
          %s655 = smul.addr %s652, 2
          %s656 = smul.addr %s655, 4
          %s657 = scalar_lea.hbm %s6, %s656
          %s658 = sshll.u32 %s643, 4
          %s659 = int_to_ptr.vmem [resolvable:$true] %s658
          %s660 = sshll.u32 %s657, 4
          %s661 = int_to_ptr.hbm [resolvable:$true] %s660
          %666 = dma.vmem_to_hbm [thread:$0]  %s659, 256, %s661, %s640, 128, 128, 8
        $region64: #{tpu_custom_call.1} parent=43 // pred_fallthru
          _
        // Predicated region
        $region65: #{tpu_custom_call.1} parent=43 // pred_check
          %p667 = pneg %p205
        $region66: #{tpu_custom_call.1} parent=43 // pred_check_branch
          %669 = sbr.rel (%p667) target = $region68
        $region67: #{tpu_custom_call.1} parent=43 // pred_region
          %s670 = smul.u32 2, %s30
          %672 = vsyncadd %s645, 0
          %s673 = smul.addr %s670, 8
          %s674 = scalar_lea.hbm %s7, %s673
          %s675 = sshll.u32 %s648, 4
          %s676 = int_to_ptr.vmem [resolvable:$true] %s675
          %s677 = sshll.u32 %s674, 4
          %s678 = int_to_ptr.hbm [resolvable:$true] %s677
          %683 = dma.vmem_to_hbm [thread:$0]  %s676, 256, %s678, %s645, 128, 128, 8
        $region68: #{tpu_custom_call.1} parent=43 // pred_fallthru
          _
      $region44: #{tpu_custom_call.1} parent=5 // pred_fallthru
        _
      %p684 = scmp.le.s32.totalorder 2, %s25
      // Predicated region
      $region69: #{tpu_custom_call.1} parent=5 // pred_check
        %p685 = pneg %p684
      $region70: #{tpu_custom_call.1} parent=5 // pred_check_branch
        %687 = sbr.rel (%p685) target = $region72
      $region71: #{tpu_custom_call.1} parent=5 // pred_region
        %s688 = ssub.s32 %s25, 2
        // Predicated region
        $region73: #{tpu_custom_call.1} parent=71 // pred_check
          %p689 = pneg %p185
        $region74: #{tpu_custom_call.1} parent=71 // pred_check_branch
          %691 = sbr.rel (%p689) target = $region76
        $region75: #{tpu_custom_call.1} parent=71 // pred_region
          %s692 = sand.u32 %s170, 1
          %s693 = scalar_lea.sflag [#allocation4], %s692
          %s694 = sand.u32 %s170, 1
          %s695 = smul.addr %s694, 16
          %s696 = scalar_lea.vmem [#allocation10], %s695
          %698 = dma.done %s693, 256
        $region76: #{tpu_custom_call.1} parent=71 // pred_fallthru
          _
        // Predicated region
        $region77: #{tpu_custom_call.1} parent=71 // pred_check
          %p699 = pneg %p211
        $region78: #{tpu_custom_call.1} parent=71 // pred_check_branch
          %701 = sbr.rel (%p699) target = $region80
        $region79: #{tpu_custom_call.1} parent=71 // pred_region
          %s702 = sand.u32 %s196, 1
          %s703 = scalar_lea.sflag [#allocation12], %s702
          %s704 = sand.u32 %s196, 1
          %s705 = smul.addr %s704, 16
          %s706 = scalar_lea.vmem [#allocation11], %s705
          %708 = dma.done %s703, 256
        $region80: #{tpu_custom_call.1} parent=71 // pred_fallthru
          _
      $region72: #{tpu_custom_call.1} parent=5 // pred_fallthru
        _
    $region6: #{tpu_custom_call.1} parent=1 // loop_footer
      %s29 = sadd.s32 1, %s25
    $region7: #{tpu_custom_call.1} parent=1 // loop_footer_branch
      %24 = sbr.rel target = $region3
    $region8: #{tpu_custom_call.1} parent=1 // loop_exit
      _
    %709 = vsyncpa [#allocation3], 1
    %s710 = scalar_lea.sflag [#allocation3], 1
    %711 = vsyncpa %s710, 1
    %712 = vsyncpa [#allocation6], 1
    %713 = vsyncpa [#allocation9], 1
    %714 = vsyncpa [#allocation4], 1
    %s715 = scalar_lea.sflag [#allocation4], 1
    %716 = vsyncpa %s715, 1
    %717 = vsyncpa [#allocation12], 1
    %s718 = scalar_lea.sflag [#allocation12], 1
    %719 = vsyncpa %s718, 1

// kernel: tpu_custom_call.1
$region0: #{tpu_custom_call.1}
  #allocation0 [shape = 'u32[]', space=smem, size = 0x4, offset = 0x4, fixed_abs, tag = 'smem constant byte address 0x4 - core index']
  #allocation1 [shape = 'u32[72,128]{1,0:T(1,128)}', space=vmem, size = 0x9000, scoped, tag = 'internal scratch']
  %s0 = inlined_call_operand.hbm [shape: bf16[32,32], index: 0, kind: input, shape index: {}]
  %s1 = inlined_call_operand.hbm [shape: bf16[32,256], index: 1, kind: input, shape index: {}]
  %s2 = inlined_call_operand.hbm [shape: f32[1,256], index: 2, kind: input, shape index: {}]
  %s3 = inlined_call_operand.vmem [shape: f32[1,256], index: 3, kind: input, shape index: {}]
  %s4 = inlined_call_operand.hbm [shape: bf16[256,128], index: 4, kind: input, shape index: {}]
  %s5 = inlined_call_operand.vmem [shape: f32[1,128], index: 5, kind: input, shape index: {}]
  %s6 = inlined_call_operand.hbm [shape: bf16[32,256], index: 6, kind: output, shape index: {0}]
  %s7 = inlined_call_operand.hbm [shape: f32[32,128], index: 7, kind: output, shape index: {1}]
  %8 = xla_tuple %s6, %s7
  %s9 = sld [smem:[#allocation0]]
  $region81: #{tpu_custom_call.1} parent=0
    _
  %s11 = ssub.s32 1, %s9
  %s12 = scalar_select 0, %s11, %s9
  $region1: #{tpu_custom_call.1} parent=0
    #allocation2 [shape = 'u8[8192]{0}', space=vmem, size = 0x2000, scoped, tag = 'input window, operand 0']
    #allocation3 [shape = 's32[2]{0}', space=sflag, size = 0x8, scoped, tag = 'scoped memory for tpu_custom_call.1']
    #allocation4 [shape = 's32[2]{0}', space=sflag, size = 0x8, scoped, tag = 'scoped memory for tpu_custom_call.1']
    #allocation5 [shape = 'u8[16384]{0}', space=vmem, size = 0x4000, scoped, tag = 'input window, operand 1, single buffered']
    #allocation6 [shape = 's32[1]{0}', space=sflag, size = 0x4, scoped, tag = 'scoped memory for tpu_custom_call.1']
    #allocation7 [shape = 'u8[1024]{0}', space=vmem, size = 0x400, scoped, tag = 'input window, operand 2, single buffered']
    #allocation8 [shape = 'u8[65536]{0}', space=vmem, size = 0x10000, scoped, tag = 'input window, operand 4, single buffered']
    #allocation9 [shape = 's32[1]{0}', space=sflag, size = 0x4, scoped, tag = 'scoped memory for tpu_custom_call.1']
    #allocation10 [shape = 'u8[16384]{0}', space=vmem, size = 0x4000, scoped, tag = 'output window, operand 0']
    #allocation11 [shape = 'u8[16384]{0}', space=vmem, size = 0x4000, scoped, tag = 'output window, operand 1']
    #allocation12 [shape = 's32[2]{0}', space=sflag, size = 0x8, scoped, tag = 'scoped memory for tpu_custom_call.1']
    %13 = vsyncpa [#allocation3], 0
    %s14 = scalar_lea.sflag [#allocation3], 1
    %15 = vsyncpa %s14, 0
    %16 = vsyncpa [#allocation6], 0
    %17 = vsyncpa [#allocation9], 0
    %18 = vsyncpa [#allocation4], 0
    %s19 = scalar_lea.sflag [#allocation4], 1
    %20 = vsyncpa %s19, 0
    %21 = vsyncpa [#allocation12], 0
    %s22 = scalar_lea.sflag [#allocation12], 1
    %23 = vsyncpa %s22, 0
    loop: start=0, step=1, limit=4
    $region2: #{tpu_custom_call.1} parent=1 // loop_pre_header
      _
    $region3: #{tpu_custom_call.1} parent=1 // loop_header
      %s25 = sphi 0, %s29
      %p26 = scmp.ge.s32.totalorder %s25, 4
      %s35 = sphi 0, %s37
      %s38 = sphi 0, %s35
      %s39 = sphi 0, %s38
      %s55 = sphi 0, %s39
      %s59 = sphi 0, %s59
      %s61 = sphi 0, %s59
      %s62 = sphi 0, %s61
      %s76 = sphi 0, %s62
      %s80 = sphi 0, %s80
      %s82 = sphi 0, %s80
      %s83 = sphi 0, %s82
      %s97 = sphi 0, %s83
      %s101 = sphi 0, %s101
      %s103 = sphi 0, %s101
      %s104 = sphi 0, %s103
      %s118 = sphi 0, %s104
      %s122 = sphi 0, %s122
      %s124 = sphi 0, %s122
      %s125 = sphi 0, %s124
      %s139 = sphi 0, %s125
      %s143 = sphi 0, %s143
      %s145 = sphi 0, %s143
      %s146 = sphi 0, %s145
      %s160 = sphi 0, %s146
      %s166 = sphi 0, %s168
      %s169 = sphi 0, %s166
      %s170 = sphi 0, %s169
      %s186 = sphi 0, %s170
      %s192 = sphi 0, %s194
      %s195 = sphi 0, %s192
      %s196 = sphi 0, %s195
      %s212 = sphi 0, %s196
    $region4: #{tpu_custom_call.1} parent=1 // loop_header_branch
      %28 = sbr.rel (%p26) target = $region8
    $region5: #{tpu_custom_call.1} parent=1 // loop_body
      %s30 = ssub.s32 %s25, 1
      %s31 = ssub.s32 %s25, 2
      %s32 = sadd.s32 %s25, 1
      %s33 = ssub.s32 %s25, %s32
      %p34 = scmp.eq.s32.totalorder %s33, 0
      %s36 = sadd.s32 %s35, 1
      %s37 = scalar_select %p34, %s35, %s36
      %p40 = pneg %p34
      %p41 = scmp.eq.s32.totalorder %s25, 1
      %p42 = por %p40, %p41
      %p43 = scmp.ne.s32.totalorder %s35, %s38
      %p44 = scmp.eq.s32.totalorder %s25, 0
      %p45 = por %p43, %p44
      %p46 = scmp.ne.s32.totalorder %s35, %s38
      %p47 = scmp.eq.s32.totalorder %s30, 1
      %p48 = por %p46, %p47
      %p49 = scmp.ne.s32.totalorder %s38, %s39
      %p50 = scmp.eq.s32.totalorder %s30, 0
      %p51 = por %p49, %p50
      %p52 = scmp.ne.s32.totalorder %s38, %s39
      %p53 = scmp.eq.s32.totalorder %s31, 1
      %p54 = por %p52, %p53
      %p56 = scmp.ne.s32.totalorder %s39, %s55
      %p57 = scmp.eq.s32.totalorder %s31, 0
      %p58 = por %p56, %p57
      %s60 = sadd.s32 %s59, 1
      %p63 = scmp.eq.s32.totalorder %s25, 1
      %p64 = scmp.ne.s32.totalorder %s59, %s61
      %p65 = scmp.eq.s32.totalorder %s25, 0
      %p66 = por %p64, %p65
      %p67 = scmp.ne.s32.totalorder %s59, %s61
      %p68 = scmp.eq.s32.totalorder %s30, 1
      %p69 = por %p67, %p68
      %p70 = scmp.ne.s32.totalorder %s61, %s62
      %p71 = scmp.eq.s32.totalorder %s30, 0
      %p72 = por %p70, %p71
      %p73 = scmp.ne.s32.totalorder %s61, %s62
      %p74 = scmp.eq.s32.totalorder %s31, 1
      %p75 = por %p73, %p74
      %p77 = scmp.ne.s32.totalorder %s62, %s76
      %p78 = scmp.eq.s32.totalorder %s31, 0
      %p79 = por %p77, %p78
      %s81 = sadd.s32 %s80, 1
      %p84 = scmp.eq.s32.totalorder %s25, 1
      %p85 = scmp.ne.s32.totalorder %s80, %s82
      %p86 = scmp.eq.s32.totalorder %s25, 0
      %p87 = por %p85, %p86
      %p88 = scmp.ne.s32.totalorder %s80, %s82
      %p89 = scmp.eq.s32.totalorder %s30, 1
      %p90 = por %p88, %p89
      %p91 = scmp.ne.s32.totalorder %s82, %s83
      %p92 = scmp.eq.s32.totalorder %s30, 0
      %p93 = por %p91, %p92
      %p94 = scmp.ne.s32.totalorder %s82, %s83
      %p95 = scmp.eq.s32.totalorder %s31, 1
      %p96 = por %p94, %p95
      %p98 = scmp.ne.s32.totalorder %s83, %s97
      %p99 = scmp.eq.s32.totalorder %s31, 0
      %p100 = por %p98, %p99
      %s102 = sadd.s32 %s101, 1
      %p105 = scmp.eq.s32.totalorder %s25, 1
      %p106 = scmp.ne.s32.totalorder %s101, %s103
      %p107 = scmp.eq.s32.totalorder %s25, 0
      %p108 = por %p106, %p107
      %p109 = scmp.ne.s32.totalorder %s101, %s103
      %p110 = scmp.eq.s32.totalorder %s30, 1
      %p111 = por %p109, %p110
      %p112 = scmp.ne.s32.totalorder %s103, %s104
      %p113 = scmp.eq.s32.totalorder %s30, 0
      %p114 = por %p112, %p113
      %p115 = scmp.ne.s32.totalorder %s103, %s104
      %p116 = scmp.eq.s32.totalorder %s31, 1
      %p117 = por %p115, %p116
      %p119 = scmp.ne.s32.totalorder %s104, %s118
      %p120 = scmp.eq.s32.totalorder %s31, 0
      %p121 = por %p119, %p120
      %s123 = sadd.s32 %s122, 1
      %p126 = scmp.eq.s32.totalorder %s25, 1
      %p127 = scmp.ne.s32.totalorder %s122, %s124
      %p128 = scmp.eq.s32.totalorder %s25, 0
      %p129 = por %p127, %p128
      %p130 = scmp.ne.s32.totalorder %s122, %s124
      %p131 = scmp.eq.s32.totalorder %s30, 1
      %p132 = por %p130, %p131
      %p133 = scmp.ne.s32.totalorder %s124, %s125
      %p134 = scmp.eq.s32.totalorder %s30, 0
      %p135 = por %p133, %p134
      %p136 = scmp.ne.s32.totalorder %s124, %s125
      %p137 = scmp.eq.s32.totalorder %s31, 1
      %p138 = por %p136, %p137
      %p140 = scmp.ne.s32.totalorder %s125, %s139
      %p141 = scmp.eq.s32.totalorder %s31, 0
      %p142 = por %p140, %p141
      %s144 = sadd.s32 %s143, 1
      %p147 = scmp.eq.s32.totalorder %s25, 1
      %p148 = scmp.ne.s32.totalorder %s143, %s145
      %p149 = scmp.eq.s32.totalorder %s25, 0
      %p150 = por %p148, %p149
      %p151 = scmp.ne.s32.totalorder %s143, %s145
      %p152 = scmp.eq.s32.totalorder %s30, 1
      %p153 = por %p151, %p152
      %p154 = scmp.ne.s32.totalorder %s145, %s146
      %p155 = scmp.eq.s32.totalorder %s30, 0
      %p156 = por %p154, %p155
      %p157 = scmp.ne.s32.totalorder %s145, %s146
      %p158 = scmp.eq.s32.totalorder %s31, 1
      %p159 = por %p157, %p158
      %p161 = scmp.ne.s32.totalorder %s146, %s160
      %p162 = scmp.eq.s32.totalorder %s31, 0
      %p163 = por %p161, %p162
      %s164 = ssub.s32 %s25, %s32
      %p165 = scmp.eq.s32.totalorder %s164, 0
      %s167 = sadd.s32 %s166, 1
      %s168 = scalar_select %p165, %s166, %s167
      %p171 = pneg %p165
      %p172 = scmp.eq.s32.totalorder %s25, 1
      %p173 = por %p171, %p172
      %p174 = scmp.ne.s32.totalorder %s166, %s169
      %p175 = scmp.eq.s32.totalorder %s25, 0
      %p176 = por %p174, %p175
      %p177 = scmp.ne.s32.totalorder %s166, %s169
      %p178 = scmp.eq.s32.totalorder %s30, 1
      %p179 = por %p177, %p178
      %p180 = scmp.ne.s32.totalorder %s169, %s170
      %p181 = scmp.eq.s32.totalorder %s30, 0
      %p182 = por %p180, %p181
      %p183 = scmp.ne.s32.totalorder %s169, %s170
      %p184 = scmp.eq.s32.totalorder %s31, 1
      %p185 = por %p183, %p184
      %p187 = scmp.ne.s32.totalorder %s170, %s186
      %p188 = scmp.eq.s32.totalorder %s31, 0
      %p189 = por %p187, %p188
      %s190 = ssub.s32 %s25, %s32
      %p191 = scmp.eq.s32.totalorder %s190, 0
      %s193 = sadd.s32 %s192, 1
      %s194 = scalar_select %p191, %s192, %s193
      %p197 = pneg %p191
      %p198 = scmp.eq.s32.totalorder %s25, 1
      %p199 = por %p197, %p198
      %p200 = scmp.ne.s32.totalorder %s192, %s195
      %p201 = scmp.eq.s32.totalorder %s25, 0
      %p202 = por %p200, %p201
      %p203 = scmp.ne.s32.totalorder %s192, %s195
      %p204 = scmp.eq.s32.totalorder %s30, 1
      %p205 = por %p203, %p204
      %p206 = scmp.ne.s32.totalorder %s195, %s196
      %p207 = scmp.eq.s32.totalorder %s30, 0
      %p208 = por %p206, %p207
      %p209 = scmp.ne.s32.totalorder %s195, %s196
      %p210 = scmp.eq.s32.totalorder %s31, 1
      %p211 = por %p209, %p210
      %p213 = scmp.ne.s32.totalorder %s196, %s212
      %p214 = scmp.eq.s32.totalorder %s31, 0
      %p215 = por %p213, %p214
      %p216 = scmp.le.s32.totalorder 1, %s25
      %p217 = scmp.lt.s32.totalorder %s25, 3
      %p218 = pnand %p216, %p217
      %p219 = pneg %p218
      // Predicated region
      $region9: #{tpu_custom_call.1} parent=5 // pred_check
        _
      $region10: #{tpu_custom_call.1} parent=5 // pred_check_branch
        %221 = sbr.rel (%p218) target = $region12
      $region11: #{tpu_custom_call.1} parent=5 // pred_region
        %s222 = ssub.s32 %s25, 1
        // Predicated region
        $region13: #{tpu_custom_call.1} parent=11 // pred_check
          %p223 = pneg %p72
        $region14: #{tpu_custom_call.1} parent=11 // pred_check_branch
          %225 = sbr.rel (%p223) target = $region16
        $region15: #{tpu_custom_call.1} parent=11 // pred_region
          %227 = vsyncadd [#allocation6], 0
          %s228 = sshll.u32 %s1, 4
          %s229 = int_to_ptr.hbm [resolvable:$true] %s228
          %s230 = sshll.u32 [#allocation5], 4
          %s231 = int_to_ptr.vmem [resolvable:$true] %s230
          %236 = dma.hbm_to_vmem [thread:$0]  %s229, 512, %s231, [#allocation6], 128, 128, 8
        $region16: #{tpu_custom_call.1} parent=11 // pred_fallthru
          _
        // Predicated region
        $region17: #{tpu_custom_call.1} parent=11 // pred_check
          %p237 = pneg %p93
        $region18: #{tpu_custom_call.1} parent=11 // pred_check_branch
          %239 = sbr.rel (%p237) target = $region20
        $region19: #{tpu_custom_call.1} parent=11 // pred_region
          %241 = vsyncadd [#allocation6], 0
          %s243 = sshll.u32 %s2, 4
          %s244 = int_to_ptr.hbm [resolvable:$true] %s243
          %s245 = sshll.u32 [#allocation7], 4
          %s246 = int_to_ptr.vmem [resolvable:$true] %s245
          %248 = dma.hbm_to_vmem [thread:$0]  %s244, 32, %s246, [#allocation6]
        $region20: #{tpu_custom_call.1} parent=11 // pred_fallthru
          _
        // Predicated region
        $region21: #{tpu_custom_call.1} parent=11 // pred_check
          %p249 = pneg %p114
        $region22: #{tpu_custom_call.1} parent=11 // pred_check_branch
          %251 = sbr.rel (%p249) target = $region24
        $region23: #{tpu_custom_call.1} parent=11 // pred_region
          _
        $region24: #{tpu_custom_call.1} parent=11 // pred_fallthru
          _
        // Predicated region
        $region25: #{tpu_custom_call.1} parent=11 // pred_check
          %p252 = pneg %p135
        $region26: #{tpu_custom_call.1} parent=11 // pred_check_branch
          %254 = sbr.rel (%p252) target = $region28
        $region27: #{tpu_custom_call.1} parent=11 // pred_region
          %256 = vsyncadd [#allocation9], 0
          %s257 = sshll.u32 %s4, 4
          %s258 = int_to_ptr.hbm [resolvable:$true] %s257
          %s259 = sshll.u32 [#allocation8], 4
          %s260 = int_to_ptr.vmem [resolvable:$true] %s259
          %265 = dma.hbm_to_vmem [thread:$0]  %s258, 2048, %s260, [#allocation9], 64, 64, 4
        $region28: #{tpu_custom_call.1} parent=11 // pred_fallthru
          _
        // Predicated region
        $region29: #{tpu_custom_call.1} parent=11 // pred_check
          %p266 = pneg %p156
        $region30: #{tpu_custom_call.1} parent=11 // pred_check_branch
          %268 = sbr.rel (%p266) target = $region32
        $region31: #{tpu_custom_call.1} parent=11 // pred_region
          _
        $region32: #{tpu_custom_call.1} parent=11 // pred_fallthru
          _
      $region12: #{tpu_custom_call.1} parent=5 // pred_fallthru
        _
      %p269 = scmp.lt.s32.totalorder %s25, 2
      // Predicated region
      $region33: #{tpu_custom_call.1} parent=5 // pred_check
        %p270 = pneg %p269
      $region34: #{tpu_custom_call.1} parent=5 // pred_check_branch
        %272 = sbr.rel (%p270) target = $region36
      $region35: #{tpu_custom_call.1} parent=5 // pred_region
        // Predicated region
        $region37: #{tpu_custom_call.1} parent=35 // pred_check
          %p273 = pneg %p45
        $region38: #{tpu_custom_call.1} parent=35 // pred_check_branch
          %275 = sbr.rel (%p273) target = $region40
        $region39: #{tpu_custom_call.1} parent=35 // pred_region
          %s276 = sand.u32 %s35, 1
          %s277 = scalar_lea.sflag [#allocation3], %s276
          %s278 = sand.u32 %s35, 1
          %s279 = smul.addr %s278, 8
          %s280 = scalar_lea.vmem [#allocation2], %s279
          %s281 = smul.u32 2, %s25
          %283 = vsyncadd %s277, 0
          %s284 = smul.addr %s281, 4
          %s285 = scalar_lea.hbm %s0, %s284
          %s286 = sshll.u32 %s285, 4
          %s287 = int_to_ptr.hbm [resolvable:$true] %s286
          %s288 = sshll.u32 %s280, 4
          %s289 = int_to_ptr.vmem [resolvable:$true] %s288
          %294 = dma.hbm_to_vmem [thread:$0]  %s287, 128, %s289, %s277, 64, 64, 4
        $region40: #{tpu_custom_call.1} parent=35 // pred_fallthru
          _
      $region36: #{tpu_custom_call.1} parent=5 // pred_fallthru
        _
      %p295 = scmp.le.s32.totalorder 1, %s25
      %p296 = scmp.lt.s32.totalorder %s25, 3
      %p297 = pnand %p295, %p296
      %p298 = pneg %p297
      // Predicated region
      $region41: #{tpu_custom_call.1} parent=5 // pred_check
        _
      $region42: #{tpu_custom_call.1} parent=5 // pred_check_branch
        %300 = sbr.rel (%p297) target = $region44
      $region43: #{tpu_custom_call.1} parent=5 // pred_region
        %s301 = ssub.s32 %s25, 1
        %s302 = sand.u32 %s38, 1
        %s303 = scalar_lea.sflag [#allocation3], %s302
        %s304 = sand.u32 %s38, 1
        %s305 = smul.addr %s304, 8
        %s306 = scalar_lea.vmem [#allocation2], %s305
        // Predicated region
        $region45: #{tpu_custom_call.1} parent=43 // pred_check
          %p307 = pneg %p51
        $region46: #{tpu_custom_call.1} parent=43 // pred_check_branch
          %309 = sbr.rel (%p307) target = $region48
        $region47: #{tpu_custom_call.1} parent=43 // pred_region
          %311 = dma.done %s303, 128
        $region48: #{tpu_custom_call.1} parent=43 // pred_fallthru
          _
        // Predicated region
        $region49: #{tpu_custom_call.1} parent=43 // pred_check
          %p312 = pneg %p72
        $region50: #{tpu_custom_call.1} parent=43 // pred_check_branch
          %314 = sbr.rel (%p312) target = $region52
        $region51: #{tpu_custom_call.1} parent=43 // pred_region
          %316 = dma.done [#allocation6], 512
        $region52: #{tpu_custom_call.1} parent=43 // pred_fallthru
          _
        // Predicated region
        $region53: #{tpu_custom_call.1} parent=43 // pred_check
          %p317 = pneg %p93
        $region54: #{tpu_custom_call.1} parent=43 // pred_check_branch
          %319 = sbr.rel (%p317) target = $region56
        $region55: #{tpu_custom_call.1} parent=43 // pred_region
          %321 = dma.done [#allocation6], 32
        $region56: #{tpu_custom_call.1} parent=43 // pred_fallthru
          _
        // Predicated region
        $region57: #{tpu_custom_call.1} parent=43 // pred_check
          %p322 = pneg %p135
        $region58: #{tpu_custom_call.1} parent=43 // pred_check_branch
          %324 = sbr.rel (%p322) target = $region60
        $region59: #{tpu_custom_call.1} parent=43 // pred_region
          %326 = dma.done [#allocation9], 2048
        $region60: #{tpu_custom_call.1} parent=43 // pred_fallthru
          _
        %s327 = sand.u32 %s38, 1
        %s328 = scalar_lea.sflag [#allocation3], %s327
        %s329 = sand.u32 %s38, 1
        %s330 = smul.addr %s329, 8
        %s331 = scalar_lea.vmem [#allocation2], %s330
        %p332 = pneg %p51
        %p333 = pneg %p48
        %p334 = pneg %p72
        %p335 = pneg %p69
        %p336 = pneg %p93
        %p337 = pneg %p90
        %p338 = pneg %p114
        %p339 = pneg %p111
        %p340 = pneg %p135
        %p341 = pneg %p132
        %p342 = pneg %p156
        %p343 = pneg %p153
        %p344 = pneg %p182
        %p345 = pneg %p179
        %s346 = sand.u32 %s169, 1
        %s347 = scalar_lea.sflag [#allocation4], %s346
        %s348 = sand.u32 %s169, 1
        %s349 = smul.addr %s348, 16
        %s350 = scalar_lea.vmem [#allocation10], %s349
        %p351 = pneg %p208
        %p352 = pneg %p205
        %s353 = sand.u32 %s195, 1
        %s354 = scalar_lea.sflag [#allocation12], %s353
        %s355 = sand.u32 %s195, 1
        %s356 = smul.addr %s355, 16
        %s357 = scalar_lea.vmem [#allocation11], %s356
        %s358 = smul.u32 2, %s30
        %s359 = smul.u32 2, %s30
        %s360 = smul.u32 2, %s30
        %v362 = vld [vmem:[%s306] sm:$0xf]
        %v363 = vld [vmem:[%s306 + $0x4] sm:$0xf]
        %v364 = vld [vmem:[#allocation5] sm:$0xff]
        %v365 = vld [vmem:[#allocation5 + $0x8] sm:$0xff]
        %v366 = vld [vmem:[#allocation5 + $0x10] sm:$0xff]
        %v367 = vld [vmem:[#allocation5 + $0x18] sm:$0xff]
        %v368 = vld [vmem:[#allocation7] sm:$0x3]
        %v370 = vperm.slane %v368, 0
        %v371 = vperm.slane %v368, 1
        %v376 = vunpack.c.l.b16 %v362
        %v377 = vunpack.c.l.b16 %v363
        %v378 = vpack.c.b16 %v377, %v376
        %v383 = vunpack.c.l.b16 %v364
        %v384 = vunpack.c.h.b16 %v364
        %v385 = vunpack.c.l.b16 %v365
        %v386 = vunpack.c.h.b16 %v365
        %v387 = vunpack.c.l.b16 %v366
        %v388 = vunpack.c.h.b16 %v366
        %v389 = vunpack.c.l.b16 %v367
        %v390 = vunpack.c.h.b16 %v367
        %v391 = vpack.c.b16 %v385, %v383
        %v392 = vpack.c.b16 %v386, %v384
        %v393 = vpack.c.b16 %v389, %v387
        %v394 = vpack.c.b16 %v390, %v388
        %vm399 = vcmask 261120
        %v401 = vsel %vm399, %v378, 0
        %403 = vmatpush.bf16.msra.mxu0 0
        %404 = vmatpush.bf16.msra.mxu0 0
        %405 = vmatpush.bf16.msra.mxu0 0
        %406 = vmatpush.bf16.msra.mxu0 0
        %407 = vmatpush.bf16.msra.mxu0 0
        %408 = vmatpush.bf16.msra.mxu0 0
        %409 = vmatpush.bf16.msra.mxu0 %v393
        %410 = vmatpush.bf16.msra.mxu0 %v391
        %411 = vmatmul.bf16.gmra.mxu0 %v401
        %v412 = vpop.f32.mrf.mxu0
        %v413 = vadd.f32 %v370, %v412
        %v414 = vpop.f32.mrf.mxu0
        %v415 = vadd.f32 %v370, %v414
        %416 = vdwg.mxu0
        %417 = vmatpush.bf16.msra.mxu0 0
        %418 = vmatpush.bf16.msra.mxu0 0
        %419 = vmatpush.bf16.msra.mxu0 0
        %420 = vmatpush.bf16.msra.mxu0 0
        %421 = vmatpush.bf16.msra.mxu0 0
        %422 = vmatpush.bf16.msra.mxu0 0
        %423 = vmatpush.bf16.msra.mxu0 %v394
        %424 = vmatpush.bf16.msra.mxu0 %v392
        %425 = vmatmul.bf16.gmra.mxu0 %v401
        %v426 = vpop.f32.mrf.mxu0
        %v427 = vadd.f32 %v371, %v426
        %v428 = vpop.f32.mrf.mxu0
        %v429 = vadd.f32 %v371, %v428
        %430 = vdwg.mxu0
        %v431 = vmax.f32 %v413, 0.0
        %v432 = vmax.f32 %v427, 0.0
        %v433 = vmax.f32 %v415, 0.0
        %v434 = vmax.f32 %v429, 0.0
        %v435 = vld [vmem:[%s3] sm:$0x3]
        %v437 = vperm.slane %v435, 0
        %v438 = vperm.slane %v435, 1
        %v441 = vadd.f32 %v431, %v437
        %v442 = vadd.f32 %v432, %v438
        %v443 = vadd.f32 %v433, %v437
        %v444 = vadd.f32 %v434, %v438
        %v445 = vpack.c.bf16 %v442, %v441
        %v446 = vpack.c.bf16 %v444, %v443
        %447 = vst [vmem:[%s350] sm:$0xff] %v445
        %448 = vst [vmem:[%s350 + $0x8] sm:$0xff] %v446
        %v449 = vld [vmem:[#allocation8] sm:$0xf]
        %v450 = vld [vmem:[#allocation8 + $0x4] sm:$0xf]
        %v451 = vld [vmem:[#allocation8 + $0x8] sm:$0xf]
        %v452 = vld [vmem:[#allocation8 + $0xc] sm:$0xf]
        %v453 = vld [vmem:[#allocation8 + $0x10] sm:$0xf]
        %v454 = vld [vmem:[#allocation8 + $0x14] sm:$0xf]
        %v455 = vld [vmem:[#allocation8 + $0x18] sm:$0xf]
        %v456 = vld [vmem:[#allocation8 + $0x1c] sm:$0xf]
        %v457 = vld [vmem:[#allocation8 + $0x20] sm:$0xf]
        %v458 = vld [vmem:[#allocation8 + $0x24] sm:$0xf]
        %v459 = vld [vmem:[#allocation8 + $0x28] sm:$0xf]
        %v460 = vld [vmem:[#allocation8 + $0x2c] sm:$0xf]
        %v461 = vld [vmem:[#allocation8 + $0x30] sm:$0xf]
        %v462 = vld [vmem:[#allocation8 + $0x34] sm:$0xf]
        %v463 = vld [vmem:[#allocation8 + $0x38] sm:$0xf]
        %v464 = vld [vmem:[#allocation8 + $0x3c] sm:$0xf]
        %v465 = vld [vmem:[#allocation8 + $0x40] sm:$0xf]
        %v466 = vld [vmem:[#allocation8 + $0x44] sm:$0xf]
        %v467 = vld [vmem:[#allocation8 + $0x48] sm:$0xf]
        %v468 = vld [vmem:[#allocation8 + $0x4c] sm:$0xf]
        %v469 = vld [vmem:[#allocation8 + $0x50] sm:$0xf]
        %v470 = vld [vmem:[#allocation8 + $0x54] sm:$0xf]
        %v471 = vld [vmem:[#allocation8 + $0x58] sm:$0xf]
        %v472 = vld [vmem:[#allocation8 + $0x5c] sm:$0xf]
        %v473 = vld [vmem:[#allocation8 + $0x60] sm:$0xf]
        %v474 = vld [vmem:[#allocation8 + $0x64] sm:$0xf]
        %v475 = vld [vmem:[#allocation8 + $0x68] sm:$0xf]
        %v476 = vld [vmem:[#allocation8 + $0x6c] sm:$0xf]
        %v477 = vld [vmem:[#allocation8 + $0x70] sm:$0xf]
        %v478 = vld [vmem:[#allocation8 + $0x74] sm:$0xf]
        %v479 = vld [vmem:[#allocation8 + $0x78] sm:$0xf]
        %v480 = vld [vmem:[#allocation8 + $0x7c] sm:$0xf]
        %v481 = vld [vmem:[%s5] sm:$0x1]
        %v483 = vperm.slane %v481, 0
        %v487 = vunpack.c.l.b16 %v445
        %v488 = vunpack.c.h.b16 %v445
        %v489 = vunpack.c.l.b16 %v446
        %v490 = vunpack.c.h.b16 %v446
        %v491 = vpack.c.b16 %v489, %v487
        %v492 = vpack.c.b16 %v490, %v488
        %v527 = vunpack.c.l.b16 %v449
        %v528 = vunpack.c.l.b16 %v450
        %v529 = vunpack.c.l.b16 %v451
        %v530 = vunpack.c.l.b16 %v452
        %v531 = vunpack.c.l.b16 %v453
        %v532 = vunpack.c.l.b16 %v454
        %v533 = vunpack.c.l.b16 %v455
        %v534 = vunpack.c.l.b16 %v456
        %v535 = vunpack.c.l.b16 %v457
        %v536 = vunpack.c.l.b16 %v458
        %v537 = vunpack.c.l.b16 %v459
        %v538 = vunpack.c.l.b16 %v460
        %v539 = vunpack.c.l.b16 %v461
        %v540 = vunpack.c.l.b16 %v462
        %v541 = vunpack.c.l.b16 %v463
        %v542 = vunpack.c.l.b16 %v464
        %v543 = vunpack.c.l.b16 %v465
        %v544 = vunpack.c.l.b16 %v466
        %v545 = vunpack.c.l.b16 %v467
        %v546 = vunpack.c.l.b16 %v468
        %v547 = vunpack.c.l.b16 %v469
        %v548 = vunpack.c.l.b16 %v470
        %v549 = vunpack.c.l.b16 %v471
        %v550 = vunpack.c.l.b16 %v472
        %v551 = vunpack.c.l.b16 %v473
        %v552 = vunpack.c.l.b16 %v474
        %v553 = vunpack.c.l.b16 %v475
        %v554 = vunpack.c.l.b16 %v476
        %v555 = vunpack.c.l.b16 %v477
        %v556 = vunpack.c.l.b16 %v478
        %v557 = vunpack.c.l.b16 %v479
        %v558 = vunpack.c.l.b16 %v480
        %v559 = vpack.c.b16 %v528, %v527
        %v560 = vpack.c.b16 %v530, %v529
        %v561 = vpack.c.b16 %v532, %v531
        %v562 = vpack.c.b16 %v534, %v533
        %v563 = vpack.c.b16 %v536, %v535
        %v564 = vpack.c.b16 %v538, %v537
        %v565 = vpack.c.b16 %v540, %v539
        %v566 = vpack.c.b16 %v542, %v541
        %v567 = vpack.c.b16 %v544, %v543
        %v568 = vpack.c.b16 %v546, %v545
        %v569 = vpack.c.b16 %v548, %v547
        %v570 = vpack.c.b16 %v550, %v549
        %v571 = vpack.c.b16 %v552, %v551
        %v572 = vpack.c.b16 %v554, %v553
        %v573 = vpack.c.b16 %v556, %v555
        %v574 = vpack.c.b16 %v558, %v557
        %591 = vmatpush.bf16.msra.mxu0 %v566
        %592 = vmatpush.bf16.msra.mxu0 %v565
        %593 = vmatpush.bf16.msra.mxu0 %v564
        %594 = vmatpush.bf16.msra.mxu0 %v563
        %595 = vmatpush.bf16.msra.mxu0 %v562
        %596 = vmatpush.bf16.msra.mxu0 %v561
        %597 = vmatpush.bf16.msra.mxu0 %v560
        %598 = vmatpush.bf16.msra.mxu0 %v559
        %599 = vmatmul.bf16.gmra.mxu0 %v491
        %v600 = vpop.f32.mrf.mxu0
        %v601 = vadd.f32 %v483, %v600
        %v602 = vpop.f32.mrf.mxu0
        %v603 = vadd.f32 %v483, %v602
        %604 = vdwg.mxu0
        %605 = vmatpush.bf16.msra.mxu0 %v574
        %606 = vmatpush.bf16.msra.mxu0 %v573
        %607 = vmatpush.bf16.msra.mxu0 %v572
        %608 = vmatpush.bf16.msra.mxu0 %v571
        %609 = vmatpush.bf16.msra.mxu0 %v570
        %610 = vmatpush.bf16.msra.mxu0 %v569
        %611 = vmatpush.bf16.msra.mxu0 %v568
        %612 = vmatpush.bf16.msra.mxu0 %v567
        %613 = vmatmul.bf16.gmra.mxu0 %v492
        %v614 = vpop.f32.mrf.mxu0
        %v615 = vadd.f32 %v601, %v614
        %v616 = vpop.f32.mrf.mxu0
        %v617 = vadd.f32 %v603, %v616
        %618 = vdwg.mxu0
        %619 = vmax.xlane.f32.xlu0 %v615
        %v620 = vpop.xlane.xlu0 %619
        %621 = vmax.xlane.f32.xlu0 %v617
        %v622 = vpop.xlane.xlu0 %621
        %v623 = vsub.f32 %v615, %v620
        %v624 = vsub.f32 %v617, %v622
        %v625 = vmul.f32 %v623, 1.442695
        %v626 = vpow.pop %v625
        %v627 = vmul.f32 %v624, 1.442695
        %v628 = vpow.pop %v627
        %629 = vadd.xlane.f32.xlu0 %v626
        %v630 = vpop.xlane.xlu0 %629
        %631 = vadd.xlane.f32.xlu0 %v628
        %v632 = vpop.xlane.xlu0 %631
        %v633 = vrcp.pop %v630
        %v634 = vrcp.pop %v632
        %v635 = vmul.f32 %v626, %v633
        %v636 = vmul.f32 %v628, %v634
        %637 = vst [vmem:[%s357] sm:$0xff] %v635
        %638 = vst [vmem:[%s357 + $0x8] sm:$0xff] %v636
        %s639 = sand.u32 %s169, 1
        %s640 = scalar_lea.sflag [#allocation4], %s639
        %s641 = sand.u32 %s169, 1
        %s642 = smul.addr %s641, 16
        %s643 = scalar_lea.vmem [#allocation10], %s642
        %s644 = sand.u32 %s195, 1
        %s645 = scalar_lea.sflag [#allocation12], %s644
        %s646 = sand.u32 %s195, 1
        %s647 = smul.addr %s646, 16
        %s648 = scalar_lea.vmem [#allocation11], %s647
        // Predicated region
        $region61: #{tpu_custom_call.1} parent=43 // pred_check
          %p649 = pneg %p179
        $region62: #{tpu_custom_call.1} parent=43 // pred_check_branch
          %651 = sbr.rel (%p649) target = $region64
        $region63: #{tpu_custom_call.1} parent=43 // pred_region
          %s652 = smul.u32 2, %s30
          %654 = vsyncadd %s640, 0
          %s655 = smul.addr %s652, 2
          %s656 = smul.addr %s655, 4
          %s657 = scalar_lea.hbm %s6, %s656
          %s658 = sshll.u32 %s643, 4
          %s659 = int_to_ptr.vmem [resolvable:$true] %s658
          %s660 = sshll.u32 %s657, 4
          %s661 = int_to_ptr.hbm [resolvable:$true] %s660
          %666 = dma.vmem_to_hbm [thread:$0]  %s659, 256, %s661, %s640, 128, 128, 8
        $region64: #{tpu_custom_call.1} parent=43 // pred_fallthru
          _
        // Predicated region
        $region65: #{tpu_custom_call.1} parent=43 // pred_check
          %p667 = pneg %p205
        $region66: #{tpu_custom_call.1} parent=43 // pred_check_branch
          %669 = sbr.rel (%p667) target = $region68
        $region67: #{tpu_custom_call.1} parent=43 // pred_region
          %s670 = smul.u32 2, %s30
          %672 = vsyncadd %s645, 0
          %s673 = smul.addr %s670, 8
          %s674 = scalar_lea.hbm %s7, %s673
          %s675 = sshll.u32 %s648, 4
          %s676 = int_to_ptr.vmem [resolvable:$true] %s675
          %s677 = sshll.u32 %s674, 4
          %s678 = int_to_ptr.hbm [resolvable:$true] %s677
          %683 = dma.vmem_to_hbm [thread:$0]  %s676, 256, %s678, %s645, 128, 128, 8
        $region68: #{tpu_custom_call.1} parent=43 // pred_fallthru
          _
      $region44: #{tpu_custom_call.1} parent=5 // pred_fallthru
        _
      %p684 = scmp.le.s32.totalorder 2, %s25
      // Predicated region
      $region69: #{tpu_custom_call.1} parent=5 // pred_check
        %p685 = pneg %p684
      $region70: #{tpu_custom_call.1} parent=5 // pred_check_branch
        %687 = sbr.rel (%p685) target = $region72
      $region71: #{tpu_custom_call.1} parent=5 // pred_region
        %s688 = ssub.s32 %s25, 2
        // Predicated region
        $region73: #{tpu_custom_call.1} parent=71 // pred_check
          %p689 = pneg %p185
        $region74: #{tpu_custom_call.1} parent=71 // pred_check_branch
          %691 = sbr.rel (%p689) target = $region76
        $region75: #{tpu_custom_call.1} parent=71 // pred_region
          %s692 = sand.u32 %s170, 1
          %s693 = scalar_lea.sflag [#allocation4], %s692
          %s694 = sand.u32 %s170, 1
          %s695 = smul.addr %s694, 16
          %s696 = scalar_lea.vmem [#allocation10], %s695
          %698 = dma.done %s693, 256
        $region76: #{tpu_custom_call.1} parent=71 // pred_fallthru
          _
        // Predicated region
        $region77: #{tpu_custom_call.1} parent=71 // pred_check
          %p699 = pneg %p211
        $region78: #{tpu_custom_call.1} parent=71 // pred_check_branch
          %701 = sbr.rel (%p699) target = $region80
        $region79: #{tpu_custom_call.1} parent=71 // pred_region
          %s702 = sand.u32 %s196, 1
          %s703 = scalar_lea.sflag [#allocation12], %s702
          %s704 = sand.u32 %s196, 1
          %s705 = smul.addr %s704, 16
          %s706 = scalar_lea.vmem [#allocation11], %s705
          %708 = dma.done %s703, 256
        $region80: #{tpu_custom_call.1} parent=71 // pred_fallthru
          _
      $region72: #{tpu_custom_call.1} parent=5 // pred_fallthru
        _
    $region6: #{tpu_custom_call.1} parent=1 // loop_footer
      %s29 = sadd.s32 1, %s25
    $region7: #{tpu_custom_call.1} parent=1 // loop_footer_branch
      %24 = sbr.rel target = $region3
    $region8: #{tpu_custom_call.1} parent=1 // loop_exit
      _
    %709 = vsyncpa [#allocation3], 1
    %s710 = scalar_lea.sflag [#allocation3], 1
    %711 = vsyncpa %s710, 1
    %712 = vsyncpa [#allocation6], 1
    %713 = vsyncpa [#allocation9], 1
    %714 = vsyncpa [#allocation4], 1
    %s715 = scalar_lea.sflag [#allocation4], 1
    %716 = vsyncpa %s715, 1
    %717 = vsyncpa [#allocation12], 1
    %s718 = scalar_lea.sflag [#allocation12], 1
    %719 = vsyncpa %s718, 1

</llo_original>
